<compile_context>
chip_gen: v5e
topology: v5e:2x2
jax: 0.10.0
libtpu: 0.0.40
codegen_flags: <defaults>
</compile_context>

<pallas_src>
import functools

import jax
import jax.numpy as jnp
from jax import lax
from jax.experimental import pallas as pl
from jax.experimental.pallas import tpu as pltpu


# ----------------------------------------------------------------------------
# Kernel A: block 0 (cin == 1).  Batch on the sublane axis -> full-vreg work.
# ----------------------------------------------------------------------------
def _block0_kernel(xv_ref, w_ref, aff_ref, o_ref, *, ksize, psz, pst, cout,
                   lout_pad):
    """Fused Conv1d('same', cin=1) + ReLU + MaxPool1d + BatchNorm1d(eval).

    xv_ref : VMEM (pst, bblk, l2)      pool-phase view xv[r, b, q] = xpad[b, q*pst + r]
    w_ref  : SMEM (cout, ksize)        conv weights (scalar reads)
    aff_ref: SMEM (3, cout)            rows: conv bias, BN scale, BN shift
    o_ref  : VMEM (bblk, cout*lout_pad) lane-dense output slab
    """
    nslab = psz + ksize - 1
    # One (bblk, lout_pad) slab per distinct offset o = j + k; all pool offsets
    # and conv taps reuse these nslab slabs (no duplicated gathers, no concat).
    slabs = [xv_ref[o % pst, :, pl.ds(o // pst, lout_pad)] for o in range(nslab)]
    for co in range(cout):
        m = None
        for j in range(psz):
            acc = slabs[j] * w_ref[co, 0]
            for k in range(1, ksize):
                acc = acc + slabs[j + k] * w_ref[co, k]
            m = acc if m is None else jnp.maximum(m, acc)
        # bias + ReLU commute with the max (monotone); BN eval is an affine.
        y = jnp.maximum(m + aff_ref[0, co], 0.0) * aff_ref[1, co] + aff_ref[2, co]
        o_ref[:, co * lout_pad:(co + 1) * lout_pad] = y


# ----------------------------------------------------------------------------
# Kernel B: deeper blocks (cin >= 8).  ksize accumulated MXU dots per pool
# offset over shared k-shifted (cin, lout_pad) slabs; cout chunked.
# ----------------------------------------------------------------------------
def _deep_kernel(xv_ref, w_ref, b_ref, sc_ref, sh_ref, o_ref, *, ksize, psz,
                 pst, cout, lout_pad, bblk, cchunk, cast_bf16):
    """xv_ref: VMEM (bblk, pst, cin, l2); w_ref: VMEM (ksize, cout, cin);
    b/sc/sh: VMEM (cout, 1); o_ref: VMEM (bblk, cout, lout_pad)."""
    nslab = psz + ksize - 1
    for b in range(bblk):
        slabs = [xv_ref[b, o % pst, :, pl.ds(o // pst, lout_pad)]
                 for o in range(nslab)]
        if cast_bf16:
            slabs = [s.astype(jnp.bfloat16) for s in slabs]
        for c0 in range(0, cout, cchunk):
            m = None
            for j in range(psz):
                acc = None
                for k in range(ksize):
                    wk = w_ref[k, c0:c0 + cchunk, :]
                    if cast_bf16:
                        wk = wk.astype(jnp.bfloat16)
                    d = jnp.dot(wk, slabs[j + k],
                                preferred_element_type=jnp.float32)
                    acc = d if acc is None else acc + d
                m = acc if m is None else jnp.maximum(m, acc)
            y = jnp.maximum(m + b_ref[c0:c0 + cchunk, :], 0.0)
            y = y * sc_ref[c0:c0 + cchunk, :] + sh_ref[c0:c0 + cchunk, :]
            o_ref[b, c0:c0 + cchunk, :] = y


def _pick_batch_block(n, requested, per_sample_step_bytes,
                      vmem_budget=24 * 1024 * 1024):
    """Samples per grid step: multiple of 8 (sublane friendly), capped by a
    per-step VMEM budget (double-buffered in+out), and keeping >= 2 parallel
    grid steps when the batch allows so both v7x TensorCores get work."""
    cap = max(8, (int(vmem_budget) // max(int(per_sample_step_bytes), 1)) // 8 * 8)
    bblk = max(8, min(int(requested) // 8 * 8, cap, 8 * pl.cdiv(n, 8)))
    while bblk > 8 and pl.cdiv(n, bblk) < 2:
        bblk -= 8
    return bblk


def convolutional_block_forward(x, params, *, cfs, psz, pst, block_index,
                                batch_block=32):
    w = params["weight"].astype(jnp.float32)            # (cout, cin, cfs)
    bias = params["bias"].astype(jnp.float32)
    gamma = params["gamma"].astype(jnp.float32)
    beta = params["beta"].astype(jnp.float32)
    run_mean = params["running_mean"].astype(jnp.float32)
    run_var = params["running_var"].astype(jnp.float32)
    eps = params["eps"]

    if block_index == 0:
        x = x.reshape(-1, 1, 201)
    x = x.astype(jnp.float32)

    n, cin, length = x.shape
    cout, _, ksize = w.shape
    pad_l = (ksize - 1) // 2                             # PyTorch 'same' split
    out_len = (length - psz) // pst + 1                  # floor-mode max_pool1d
    lout_pad = 128 * pl.cdiv(out_len, 128)               # lane-dense out width

    # Pool-phase view length: covers every q = o//pst + p the kernel reads and
    # the whole 'same'-padded input; everything past the real data is zeros.
    l2 = max(lout_pad + (psz + ksize - 2) // pst, pl.cdiv(pad_l + length, pst))
    pad_r = l2 * pst - pad_l - length

    # Eval-mode BatchNorm folded into one affine.
    scale = gamma / jnp.sqrt(run_var + eps)
    shift = beta - run_mean * scale

    if cin == 1:
        # ---- block 0: batch-on-sublane VPU path ------------------------------
        per_sample = 4 * 2 * (pst * l2 + cout * lout_pad)
        bblk = _pick_batch_block(n, batch_block, per_sample)
        n_pad = bblk * pl.cdiv(n, bblk)

        xpad = jnp.pad(x[:, 0, :], ((0, n_pad - n), (pad_l, pad_r)))
        # xv[r, b, q] = xpad[b, q*pst + r]  (pool-phase split)
        xv = jnp.transpose(xpad.reshape(n_pad, l2, pst), (2, 0, 1))

        w2 = w[:, 0, :]                                  # (cout, ksize)
        aff = jnp.stack([bias, scale, shift])            # (3, cout)

        step_bytes = bblk * per_sample
        kernel = functools.partial(_block0_kernel, ksize=ksize, psz=psz,
                                   pst=pst, cout=cout, lout_pad=lout_pad)
        out_pad = pl.pallas_call(
            kernel,
            out_shape=jax.ShapeDtypeStruct((n_pad, cout * lout_pad), jnp.float32),
            grid=(n_pad // bblk,),
            in_specs=[
                pl.BlockSpec((pst, bblk, l2), lambda i: (0, i, 0)),
                pl.BlockSpec(memory_space=pltpu.MemorySpace.SMEM),
                pl.BlockSpec(memory_space=pltpu.MemorySpace.SMEM),
            ],
            out_specs=pl.BlockSpec((bblk, cout * lout_pad), lambda i: (i, 0)),
            compiler_params=pltpu.CompilerParams(
                dimension_semantics=("parallel",),
                vmem_limit_bytes=int(min(48 * 2**20,
                                         max(32 * 2**20, 4 * step_bytes))),
                # Let XLA fuse the pad/reshape/transpose producing xv into the
                # input DMA instead of materializing an extra HBM pass.
                allow_input_fusion=[True, False, False],
            ),
        )(xv, w2, aff)
        out = out_pad.reshape(n_pad, cout, lout_pad)
    else:
        # ---- deeper blocks: channels-on-sublane MXU path ---------------------
        cchunk = min(cout, 128)                          # bound vreg liveness
        cast_bf16 = cin >= 64                            # bf16 MXU only when big
        per_sample = 4 * 2 * (pst * cin * l2 + cout * lout_pad)
        bblk = _pick_batch_block(n, batch_block, per_sample)
        n_pad = bblk * pl.cdiv(n, bblk)

        xpad = jnp.pad(x, ((0, n_pad - n), (0, 0), (pad_l, pad_r)))
        # xv[b, r, ci, q] = xpad[b, ci, q*pst + r]
        xv = jnp.transpose(xpad.reshape(n_pad, cin, l2, pst), (0, 3, 1, 2))

        w3 = jnp.transpose(w, (2, 0, 1))                 # (ksize, cout, cin)
        b2 = bias.reshape(cout, 1)
        sc2 = scale.reshape(cout, 1)
        sh2 = shift.reshape(cout, 1)

        step_bytes = bblk * per_sample
        kernel = functools.partial(_deep_kernel, ksize=ksize, psz=psz, pst=pst,
                                   cout=cout, lout_pad=lout_pad, bblk=bblk,
                                   cchunk=cchunk, cast_bf16=cast_bf16)
        out = pl.pallas_call(
            kernel,
            out_shape=jax.ShapeDtypeStruct((n_pad, cout, lout_pad), jnp.float32),
            grid=(n_pad // bblk,),
            in_specs=[
                pl.BlockSpec((bblk, pst, cin, l2), lambda i: (i, 0, 0, 0)),
                pl.BlockSpec((ksize, cout, cin), lambda i: (0, 0, 0)),
                pl.BlockSpec((cout, 1), lambda i: (0, 0)),
                pl.BlockSpec((cout, 1), lambda i: (0, 0)),
                pl.BlockSpec((cout, 1), lambda i: (0, 0)),
            ],
            out_specs=pl.BlockSpec((bblk, cout, lout_pad), lambda i: (i, 0, 0)),
            compiler_params=pltpu.CompilerParams(
                dimension_semantics=("parallel",),
                vmem_limit_bytes=int(min(48 * 2**20,
                                         max(32 * 2**20, 4 * step_bytes))),
                allow_input_fusion=[True, False, False, False, False],
            ),
        )(xv, w3, b2, sc2, sh2)

    return out[:n, :, :out_len]


def reference_forward(x, params, *, cfs, psz, pst, block_index):
    """Pure-JAX reference mirroring the PyTorch forward (eval mode)."""
    if block_index == 0:
        x = x.reshape(-1, 1, 201)
    x = x.astype(jnp.float32)
    pad_l = (cfs - 1) // 2
    pad_r = (cfs - 1) - pad_l
    y = lax.conv_general_dilated(
        x, params["weight"].astype(jnp.float32), (1,), [(pad_l, pad_r)],
        dimension_numbers=("NCH", "OIH", "NCH"),
        precision=lax.Precision.HIGHEST)
    y = jnp.maximum(y + params["bias"][None, :, None], 0.0)
    y = lax.reduce_window(y, -jnp.inf, lax.max, (1, 1, psz), (1, 1, pst), "VALID")
    scale = params["gamma"] / jnp.sqrt(params["running_var"] + params["eps"])
    shift = params["beta"] - params["running_mean"] * scale
    return y * scale[None, :, None] + shift[None, :, None]


if __name__ == "__main__":
    # Module config: ConvolutionalBlock(cfs=3, cbff=2, psz=2, pst=2, rho=0.2, i)
    cfs, cbff, psz, pst = 3, 2, 2, 2
    key = jax.random.PRNGKey(0)

    def make_params(kw, kb, kg, kbt, cin, cout):
        bound = (cin * cfs) ** -0.5
        return {
            "weight": jax.random.uniform(kw, (cout, cin, cfs), jnp.float32,
                                         -bound, bound),
            "bias": jax.random.uniform(kb, (cout,), jnp.float32, -bound, bound),
            "gamma": 1.0 + 0.1 * jax.random.normal(kg, (cout,), jnp.float32),
            "beta": 0.1 * jax.random.normal(kbt, (cout,), jnp.float32),
            "running_mean": 0.05 * jax.random.normal(kg, (cout,), jnp.float32),
            "running_var": 1.0 + 0.1 * jax.random.uniform(kb, (cout,), jnp.float32),
            "eps": 1e-5,
        }

    # ---- block 0 (cin=1 -> cout=16): batch-on-sublane VPU path --------------
    cin0, cout0 = 1, cbff ** 4
    batch, gv_length = 16, 201
    k1, k2, k3, k4, k5, key = jax.random.split(key, 6)
    x0 = jax.random.normal(k1, (batch, gv_length), dtype=jnp.float32)
    params0 = make_params(k2, k3, k4, k5, cin0, cout0)

    out0 = convolutional_block_forward(x0, params0, cfs=cfs, psz=psz, pst=pst,
                                       block_index=0, batch_block=32)
    out0 = jax.block_until_ready(out0)
    ref0 = reference_forward(x0, params0, cfs=cfs, psz=psz, pst=pst, block_index=0)
    out_len0 = (gv_length - psz) // pst + 1
    assert out0.shape == (batch, cout0, out_len0)
    assert jnp.allclose(out0, ref0, atol=1e-3, rtol=1e-3), "block-0 mismatch"

    # ---- block 1 (cin=16 -> cout=32): accumulated-dot MXU path --------------
    cin1, cout1 = cbff ** 4, cbff ** 5
    len1 = out_len0
    k6, k7, k8, k9, k10, key = jax.random.split(key, 6)
    x1 = jax.random.normal(k6, (batch, cin1, len1), dtype=jnp.float32)
    params1 = make_params(k7, k8, k9, k10, cin1, cout1)

    out1 = convolutional_block_forward(x1, params1, cfs=cfs, psz=psz, pst=pst,
                                       block_index=1, batch_block=32)
    out1 = jax.block_until_ready(out1)
    ref1 = reference_forward(x1, params1, cfs=cfs, psz=psz, pst=pst, block_index=1)
    out_len1 = (len1 - psz) // pst + 1
    assert out1.shape == (batch, cout1, out_len1)
    assert jnp.allclose(out1, ref1, atol=1e-3, rtol=1e-3), "block-1 mismatch"

    print("KERNEL_OK")
</pallas_src>

<mosaic_0001>
module attributes {stable_mosaic.version = 11 : i64} {
  func.func @_block0_kernel(%arg0: i32, %arg1: memref<2x8x129xf32, #tpu.memory_space<vmem>>, %arg2: memref<16x3xf32, #tpu.memory_space<smem>>, %arg3: memref<3x16xf32, #tpu.memory_space<smem>>, %arg4: memref<8x2048xf32, #tpu.memory_space<vmem>>) attributes {dimension_semantics = [#tpu.dimension_semantics<parallel>], iteration_bounds = array<i64: 2>, scalar_prefetch = 0 : i64, scratch_operands = 0 : i64, tpu.core_type = #tpu.core_type<tc>, window_params = [{transform_indices = @transform_0, window_bounds = array<i64: 2, 8, 129>}, {transform_indices = @transform_1, window_bounds = array<i64: 16, 3>}, {transform_indices = @transform_2, window_bounds = array<i64: 3, 16>}, {transform_indices = @transform_3, window_bounds = array<i64: 8, 2048>}]} {
    %c0 = arith.constant 0 : index
    %c0_0 = arith.constant 0 : index
    %c0_1 = arith.constant 0 : index
    %0 = vector.load %arg1[%c0, %c0_0, %c0_1] : memref<2x8x129xf32, #tpu.memory_space<vmem>>, vector<1x8x128xf32>
    %1 = vector.shape_cast %0 : vector<1x8x128xf32> to vector<8x128xf32>
    %c1 = arith.constant 1 : index
    %c0_2 = arith.constant 0 : index
    %c0_3 = arith.constant 0 : index
    %2 = vector.load %arg1[%c1, %c0_2, %c0_3] : memref<2x8x129xf32, #tpu.memory_space<vmem>>, vector<1x8x128xf32>
    %3 = vector.shape_cast %2 : vector<1x8x128xf32> to vector<8x128xf32>
    %c0_4 = arith.constant 0 : index
    %c0_5 = arith.constant 0 : index
    %c1_6 = arith.constant 1 : index
    %4 = vector.load %arg1[%c0_4, %c0_5, %c1_6] : memref<2x8x129xf32, #tpu.memory_space<vmem>>, vector<1x8x128xf32>
    %5 = vector.shape_cast %4 : vector<1x8x128xf32> to vector<8x128xf32>
    %c1_7 = arith.constant 1 : index
    %c0_8 = arith.constant 0 : index
    %c1_9 = arith.constant 1 : index
    %6 = vector.load %arg1[%c1_7, %c0_8, %c1_9] : memref<2x8x129xf32, #tpu.memory_space<vmem>>, vector<1x8x128xf32>
    %7 = vector.shape_cast %6 : vector<1x8x128xf32> to vector<8x128xf32>
    %c0_10 = arith.constant 0 : index
    %c0_11 = arith.constant 0 : index
    %8 = memref.load %arg2[%c0_10, %c0_11] : memref<16x3xf32, #tpu.memory_space<smem>>
    %9 = vector.broadcast %8 : f32 to vector<8x128xf32>
    %10 = arith.mulf %1, %9 : vector<8x128xf32>
    %c0_12 = arith.constant 0 : index
    %c1_13 = arith.constant 1 : index
    %11 = memref.load %arg2[%c0_12, %c1_13] : memref<16x3xf32, #tpu.memory_space<smem>>
    %12 = vector.broadcast %11 : f32 to vector<8x128xf32>
    %13 = arith.mulf %3, %12 : vector<8x128xf32>
    %14 = arith.addf %10, %13 : vector<8x128xf32>
    %c0_14 = arith.constant 0 : index
    %c2 = arith.constant 2 : index
    %15 = memref.load %arg2[%c0_14, %c2] : memref<16x3xf32, #tpu.memory_space<smem>>
    %16 = vector.broadcast %15 : f32 to vector<8x128xf32>
    %17 = arith.mulf %5, %16 : vector<8x128xf32>
    %18 = arith.addf %14, %17 : vector<8x128xf32>
    %c0_15 = arith.constant 0 : index
    %c0_16 = arith.constant 0 : index
    %19 = memref.load %arg2[%c0_15, %c0_16] : memref<16x3xf32, #tpu.memory_space<smem>>
    %20 = vector.broadcast %19 : f32 to vector<8x128xf32>
    %21 = arith.mulf %3, %20 : vector<8x128xf32>
    %c0_17 = arith.constant 0 : index
    %c1_18 = arith.constant 1 : index
    %22 = memref.load %arg2[%c0_17, %c1_18] : memref<16x3xf32, #tpu.memory_space<smem>>
    %23 = vector.broadcast %22 : f32 to vector<8x128xf32>
    %24 = arith.mulf %5, %23 : vector<8x128xf32>
    %25 = arith.addf %21, %24 : vector<8x128xf32>
    %c0_19 = arith.constant 0 : index
    %c2_20 = arith.constant 2 : index
    %26 = memref.load %arg2[%c0_19, %c2_20] : memref<16x3xf32, #tpu.memory_space<smem>>
    %27 = vector.broadcast %26 : f32 to vector<8x128xf32>
    %28 = arith.mulf %7, %27 : vector<8x128xf32>
    %29 = arith.addf %25, %28 : vector<8x128xf32>
    %30 = arith.maximumf %18, %29 : vector<8x128xf32>
    %c0_21 = arith.constant 0 : index
    %c0_22 = arith.constant 0 : index
    %31 = memref.load %arg3[%c0_21, %c0_22] : memref<3x16xf32, #tpu.memory_space<smem>>
    %32 = vector.broadcast %31 : f32 to vector<8x128xf32>
    %33 = arith.addf %30, %32 : vector<8x128xf32>
    %cst = arith.constant 0.000000e+00 : f32
    %34 = vector.broadcast %cst : f32 to vector<8x128xf32>
    %35 = arith.maximumf %33, %34 : vector<8x128xf32>
    %c1_23 = arith.constant 1 : index
    %c0_24 = arith.constant 0 : index
    %36 = memref.load %arg3[%c1_23, %c0_24] : memref<3x16xf32, #tpu.memory_space<smem>>
    %37 = vector.broadcast %36 : f32 to vector<8x128xf32>
    %38 = arith.mulf %35, %37 : vector<8x128xf32>
    %c2_25 = arith.constant 2 : index
    %c0_26 = arith.constant 0 : index
    %39 = memref.load %arg3[%c2_25, %c0_26] : memref<3x16xf32, #tpu.memory_space<smem>>
    %40 = vector.broadcast %39 : f32 to vector<8x128xf32>
    %41 = arith.addf %38, %40 : vector<8x128xf32>
    %c0_27 = arith.constant 0 : index
    %c0_28 = arith.constant 0 : index
    %42 = vector.load %arg4[%c0_27, %c0_28] : memref<8x2048xf32, #tpu.memory_space<vmem>>, vector<8x128xf32>
    tpu.vector_store %arg4[%c0_27, %c0_28], %41 {strides = array<i32>} : memref<8x2048xf32, #tpu.memory_space<vmem>>, vector<8x128xf32>,
    %c1_29 = arith.constant 1 : index
    %c0_30 = arith.constant 0 : index
    %43 = memref.load %arg2[%c1_29, %c0_30] : memref<16x3xf32, #tpu.memory_space<smem>>
    %44 = vector.broadcast %43 : f32 to vector<8x128xf32>
    %45 = arith.mulf %1, %44 : vector<8x128xf32>
    %c1_31 = arith.constant 1 : index
    %c1_32 = arith.constant 1 : index
    %46 = memref.load %arg2[%c1_31, %c1_32] : memref<16x3xf32, #tpu.memory_space<smem>>
    %47 = vector.broadcast %46 : f32 to vector<8x128xf32>
    %48 = arith.mulf %3, %47 : vector<8x128xf32>
    %49 = arith.addf %45, %48 : vector<8x128xf32>
    %c1_33 = arith.constant 1 : index
    %c2_34 = arith.constant 2 : index
    %50 = memref.load %arg2[%c1_33, %c2_34] : memref<16x3xf32, #tpu.memory_space<smem>>
    %51 = vector.broadcast %50 : f32 to vector<8x128xf32>
    %52 = arith.mulf %5, %51 : vector<8x128xf32>
    %53 = arith.addf %49, %52 : vector<8x128xf32>
    %c1_35 = arith.constant 1 : index
    %c0_36 = arith.constant 0 : index
    %54 = memref.load %arg2[%c1_35, %c0_36] : memref<16x3xf32, #tpu.memory_space<smem>>
    %55 = vector.broadcast %54 : f32 to vector<8x128xf32>
    %56 = arith.mulf %3, %55 : vector<8x128xf32>
    %c1_37 = arith.constant 1 : index
    %c1_38 = arith.constant 1 : index
    %57 = memref.load %arg2[%c1_37, %c1_38] : memref<16x3xf32, #tpu.memory_space<smem>>
    %58 = vector.broadcast %57 : f32 to vector<8x128xf32>
    %59 = arith.mulf %5, %58 : vector<8x128xf32>
    %60 = arith.addf %56, %59 : vector<8x128xf32>
    %c1_39 = arith.constant 1 : index
    %c2_40 = arith.constant 2 : index
    %61 = memref.load %arg2[%c1_39, %c2_40] : memref<16x3xf32, #tpu.memory_space<smem>>
    %62 = vector.broadcast %61 : f32 to vector<8x128xf32>
    %63 = arith.mulf %7, %62 : vector<8x128xf32>
    %64 = arith.addf %60, %63 : vector<8x128xf32>
    %65 = arith.maximumf %53, %64 : vector<8x128xf32>
    %c0_41 = arith.constant 0 : index
    %c1_42 = arith.constant 1 : index
    %66 = memref.load %arg3[%c0_41, %c1_42] : memref<3x16xf32, #tpu.memory_space<smem>>
    %67 = vector.broadcast %66 : f32 to vector<8x128xf32>
    %68 = arith.addf %65, %67 : vector<8x128xf32>
    %cst_43 = arith.constant 0.000000e+00 : f32
    %69 = vector.broadcast %cst_43 : f32 to vector<8x128xf32>
    %70 = arith.maximumf %68, %69 : vector<8x128xf32>
    %c1_44 = arith.constant 1 : index
    %c1_45 = arith.constant 1 : index
    %71 = memref.load %arg3[%c1_44, %c1_45] : memref<3x16xf32, #tpu.memory_space<smem>>
    %72 = vector.broadcast %71 : f32 to vector<8x128xf32>
    %73 = arith.mulf %70, %72 : vector<8x128xf32>
    %c2_46 = arith.constant 2 : index
    %c1_47 = arith.constant 1 : index
    %74 = memref.load %arg3[%c2_46, %c1_47] : memref<3x16xf32, #tpu.memory_space<smem>>
    %75 = vector.broadcast %74 : f32 to vector<8x128xf32>
    %76 = arith.addf %73, %75 : vector<8x128xf32>
    %c0_48 = arith.constant 0 : index
    %c128 = arith.constant 128 : index
    %77 = vector.load %arg4[%c0_48, %c128] : memref<8x2048xf32, #tpu.memory_space<vmem>>, vector<8x128xf32>
    tpu.vector_store %arg4[%c0_48, %c128], %76 {strides = array<i32>} : memref<8x2048xf32, #tpu.memory_space<vmem>>, vector<8x128xf32>,
    %c2_49 = arith.constant 2 : index
    %c0_50 = arith.constant 0 : index
    %78 = memref.load %arg2[%c2_49, %c0_50] : memref<16x3xf32, #tpu.memory_space<smem>>
    %79 = vector.broadcast %78 : f32 to vector<8x128xf32>
    %80 = arith.mulf %1, %79 : vector<8x128xf32>
    %c2_51 = arith.constant 2 : index
    %c1_52 = arith.constant 1 : index
    %81 = memref.load %arg2[%c2_51, %c1_52] : memref<16x3xf32, #tpu.memory_space<smem>>
    %82 = vector.broadcast %81 : f32 to vector<8x128xf32>
    %83 = arith.mulf %3, %82 : vector<8x128xf32>
    %84 = arith.addf %80, %83 : vector<8x128xf32>
    %c2_53 = arith.constant 2 : index
    %c2_54 = arith.constant 2 : index
    %85 = memref.load %arg2[%c2_53, %c2_54] : memref<16x3xf32, #tpu.memory_space<smem>>
    %86 = vector.broadcast %85 : f32 to vector<8x128xf32>
    %87 = arith.mulf %5, %86 : vector<8x128xf32>
    %88 = arith.addf %84, %87 : vector<8x128xf32>
    %c2_55 = arith.constant 2 : index
    %c0_56 = arith.constant 0 : index
    %89 = memref.load %arg2[%c2_55, %c0_56] : memref<16x3xf32, #tpu.memory_space<smem>>
    %90 = vector.broadcast %89 : f32 to vector<8x128xf32>
    %91 = arith.mulf %3, %90 : vector<8x128xf32>
    %c2_57 = arith.constant 2 : index
    %c1_58 = arith.constant 1 : index
    %92 = memref.load %arg2[%c2_57, %c1_58] : memref<16x3xf32, #tpu.memory_space<smem>>
    %93 = vector.broadcast %92 : f32 to vector<8x128xf32>
    %94 = arith.mulf %5, %93 : vector<8x128xf32>
    %95 = arith.addf %91, %94 : vector<8x128xf32>
    %c2_59 = arith.constant 2 : index
    %c2_60 = arith.constant 2 : index
    %96 = memref.load %arg2[%c2_59, %c2_60] : memref<16x3xf32, #tpu.memory_space<smem>>
    %97 = vector.broadcast %96 : f32 to vector<8x128xf32>
    %98 = arith.mulf %7, %97 : vector<8x128xf32>
    %99 = arith.addf %95, %98 : vector<8x128xf32>
    %100 = arith.maximumf %88, %99 : vector<8x128xf32>
    %c0_61 = arith.constant 0 : index
    %c2_62 = arith.constant 2 : index
    %101 = memref.load %arg3[%c0_61, %c2_62] : memref<3x16xf32, #tpu.memory_space<smem>>
    %102 = vector.broadcast %101 : f32 to vector<8x128xf32>
    %103 = arith.addf %100, %102 : vector<8x128xf32>
    %cst_63 = arith.constant 0.000000e+00 : f32
    %104 = vector.broadcast %cst_63 : f32 to vector<8x128xf32>
    %105 = arith.maximumf %103, %104 : vector<8x128xf32>
    %c1_64 = arith.constant 1 : index
    %c2_65 = arith.constant 2 : index
    %106 = memref.load %arg3[%c1_64, %c2_65] : memref<3x16xf32, #tpu.memory_space<smem>>
    %107 = vector.broadcast %106 : f32 to vector<8x128xf32>
    %108 = arith.mulf %105, %107 : vector<8x128xf32>
    %c2_66 = arith.constant 2 : index
    %c2_67 = arith.constant 2 : index
    %109 = memref.load %arg3[%c2_66, %c2_67] : memref<3x16xf32, #tpu.memory_space<smem>>
    %110 = vector.broadcast %109 : f32 to vector<8x128xf32>
    %111 = arith.addf %108, %110 : vector<8x128xf32>
    %c0_68 = arith.constant 0 : index
    %c256 = arith.constant 256 : index
    %112 = vector.load %arg4[%c0_68, %c256] : memref<8x2048xf32, #tpu.memory_space<vmem>>, vector<8x128xf32>
    tpu.vector_store %arg4[%c0_68, %c256], %111 {strides = array<i32>} : memref<8x2048xf32, #tpu.memory_space<vmem>>, vector<8x128xf32>,
    %c3 = arith.constant 3 : index
    %c0_69 = arith.constant 0 : index
    %113 = memref.load %arg2[%c3, %c0_69] : memref<16x3xf32, #tpu.memory_space<smem>>
    %114 = vector.broadcast %113 : f32 to vector<8x128xf32>
    %115 = arith.mulf %1, %114 : vector<8x128xf32>
    %c3_70 = arith.constant 3 : index
    %c1_71 = arith.constant 1 : index
    %116 = memref.load %arg2[%c3_70, %c1_71] : memref<16x3xf32, #tpu.memory_space<smem>>
    %117 = vector.broadcast %116 : f32 to vector<8x128xf32>
    %118 = arith.mulf %3, %117 : vector<8x128xf32>
    %119 = arith.addf %115, %118 : vector<8x128xf32>
    %c3_72 = arith.constant 3 : index
    %c2_73 = arith.constant 2 : index
    %120 = memref.load %arg2[%c3_72, %c2_73] : memref<16x3xf32, #tpu.memory_space<smem>>
    %121 = vector.broadcast %120 : f32 to vector<8x128xf32>
    %122 = arith.mulf %5, %121 : vector<8x128xf32>
    %123 = arith.addf %119, %122 : vector<8x128xf32>
    %c3_74 = arith.constant 3 : index
    %c0_75 = arith.constant 0 : index
    %124 = memref.load %arg2[%c3_74, %c0_75] : memref<16x3xf32, #tpu.memory_space<smem>>
    %125 = vector.broadcast %124 : f32 to vector<8x128xf32>
    %126 = arith.mulf %3, %125 : vector<8x128xf32>
    %c3_76 = arith.constant 3 : index
    %c1_77 = arith.constant 1 : index
    %127 = memref.load %arg2[%c3_76, %c1_77] : memref<16x3xf32, #tpu.memory_space<smem>>
    %128 = vector.broadcast %127 : f32 to vector<8x128xf32>
    %129 = arith.mulf %5, %128 : vector<8x128xf32>
    %130 = arith.addf %126, %129 : vector<8x128xf32>
    %c3_78 = arith.constant 3 : index
    %c2_79 = arith.constant 2 : index
    %131 = memref.load %arg2[%c3_78, %c2_79] : memref<16x3xf32, #tpu.memory_space<smem>>
    %132 = vector.broadcast %131 : f32 to vector<8x128xf32>
    %133 = arith.mulf %7, %132 : vector<8x128xf32>
    %134 = arith.addf %130, %133 : vector<8x128xf32>
    %135 = arith.maximumf %123, %134 : vector<8x128xf32>
    %c0_80 = arith.constant 0 : index
    %c3_81 = arith.constant 3 : index
    %136 = memref.load %arg3[%c0_80, %c3_81] : memref<3x16xf32, #tpu.memory_space<smem>>
    %137 = vector.broadcast %136 : f32 to vector<8x128xf32>
    %138 = arith.addf %135, %137 : vector<8x128xf32>
    %cst_82 = arith.constant 0.000000e+00 : f32
    %139 = vector.broadcast %cst_82 : f32 to vector<8x128xf32>
    %140 = arith.maximumf %138, %139 : vector<8x128xf32>
    %c1_83 = arith.constant 1 : index
    %c3_84 = arith.constant 3 : index
    %141 = memref.load %arg3[%c1_83, %c3_84] : memref<3x16xf32, #tpu.memory_space<smem>>
    %142 = vector.broadcast %141 : f32 to vector<8x128xf32>
    %143 = arith.mulf %140, %142 : vector<8x128xf32>
    %c2_85 = arith.constant 2 : index
    %c3_86 = arith.constant 3 : index
    %144 = memref.load %arg3[%c2_85, %c3_86] : memref<3x16xf32, #tpu.memory_space<smem>>
    %145 = vector.broadcast %144 : f32 to vector<8x128xf32>
    %146 = arith.addf %143, %145 : vector<8x128xf32>
    %c0_87 = arith.constant 0 : index
    %c384 = arith.constant 384 : index
    %147 = vector.load %arg4[%c0_87, %c384] : memref<8x2048xf32, #tpu.memory_space<vmem>>, vector<8x128xf32>
    tpu.vector_store %arg4[%c0_87, %c384], %146 {strides = array<i32>} : memref<8x2048xf32, #tpu.memory_space<vmem>>, vector<8x128xf32>,
    %c4 = arith.constant 4 : index
    %c0_88 = arith.constant 0 : index
    %148 = memref.load %arg2[%c4, %c0_88] : memref<16x3xf32, #tpu.memory_space<smem>>
    %149 = vector.broadcast %148 : f32 to vector<8x128xf32>
    %150 = arith.mulf %1, %149 : vector<8x128xf32>
    %c4_89 = arith.constant 4 : index
    %c1_90 = arith.constant 1 : index
    %151 = memref.load %arg2[%c4_89, %c1_90] : memref<16x3xf32, #tpu.memory_space<smem>>
    %152 = vector.broadcast %151 : f32 to vector<8x128xf32>
    %153 = arith.mulf %3, %152 : vector<8x128xf32>
    %154 = arith.addf %150, %153 : vector<8x128xf32>
    %c4_91 = arith.constant 4 : index
    %c2_92 = arith.constant 2 : index
    %155 = memref.load %arg2[%c4_91, %c2_92] : memref<16x3xf32, #tpu.memory_space<smem>>
    %156 = vector.broadcast %155 : f32 to vector<8x128xf32>
    %157 = arith.mulf %5, %156 : vector<8x128xf32>
    %158 = arith.addf %154, %157 : vector<8x128xf32>
    %c4_93 = arith.constant 4 : index
    %c0_94 = arith.constant 0 : index
    %159 = memref.load %arg2[%c4_93, %c0_94] : memref<16x3xf32, #tpu.memory_space<smem>>
    %160 = vector.broadcast %159 : f32 to vector<8x128xf32>
    %161 = arith.mulf %3, %160 : vector<8x128xf32>
    %c4_95 = arith.constant 4 : index
    %c1_96 = arith.constant 1 : index
    %162 = memref.load %arg2[%c4_95, %c1_96] : memref<16x3xf32, #tpu.memory_space<smem>>
    %163 = vector.broadcast %162 : f32 to vector<8x128xf32>
    %164 = arith.mulf %5, %163 : vector<8x128xf32>
    %165 = arith.addf %161, %164 : vector<8x128xf32>
    %c4_97 = arith.constant 4 : index
    %c2_98 = arith.constant 2 : index
    %166 = memref.load %arg2[%c4_97, %c2_98] : memref<16x3xf32, #tpu.memory_space<smem>>
    %167 = vector.broadcast %166 : f32 to vector<8x128xf32>
    %168 = arith.mulf %7, %167 : vector<8x128xf32>
    %169 = arith.addf %165, %168 : vector<8x128xf32>
    %170 = arith.maximumf %158, %169 : vector<8x128xf32>
    %c0_99 = arith.constant 0 : index
    %c4_100 = arith.constant 4 : index
    %171 = memref.load %arg3[%c0_99, %c4_100] : memref<3x16xf32, #tpu.memory_space<smem>>
    %172 = vector.broadcast %171 : f32 to vector<8x128xf32>
    %173 = arith.addf %170, %172 : vector<8x128xf32>
    %cst_101 = arith.constant 0.000000e+00 : f32
    %174 = vector.broadcast %cst_101 : f32 to vector<8x128xf32>
    %175 = arith.maximumf %173, %174 : vector<8x128xf32>
    %c1_102 = arith.constant 1 : index
    %c4_103 = arith.constant 4 : index
    %176 = memref.load %arg3[%c1_102, %c4_103] : memref<3x16xf32, #tpu.memory_space<smem>>
    %177 = vector.broadcast %176 : f32 to vector<8x128xf32>
    %178 = arith.mulf %175, %177 : vector<8x128xf32>
    %c2_104 = arith.constant 2 : index
    %c4_105 = arith.constant 4 : index
    %179 = memref.load %arg3[%c2_104, %c4_105] : memref<3x16xf32, #tpu.memory_space<smem>>
    %180 = vector.broadcast %179 : f32 to vector<8x128xf32>
    %181 = arith.addf %178, %180 : vector<8x128xf32>
    %c0_106 = arith.constant 0 : index
    %c512 = arith.constant 512 : index
    %182 = vector.load %arg4[%c0_106, %c512] : memref<8x2048xf32, #tpu.memory_space<vmem>>, vector<8x128xf32>
    tpu.vector_store %arg4[%c0_106, %c512], %181 {strides = array<i32>} : memref<8x2048xf32, #tpu.memory_space<vmem>>, vector<8x128xf32>,
    %c5 = arith.constant 5 : index
    %c0_107 = arith.constant 0 : index
    %183 = memref.load %arg2[%c5, %c0_107] : memref<16x3xf32, #tpu.memory_space<smem>>
    %184 = vector.broadcast %183 : f32 to vector<8x128xf32>
    %185 = arith.mulf %1, %184 : vector<8x128xf32>
    %c5_108 = arith.constant 5 : index
    %c1_109 = arith.constant 1 : index
    %186 = memref.load %arg2[%c5_108, %c1_109] : memref<16x3xf32, #tpu.memory_space<smem>>
    %187 = vector.broadcast %186 : f32 to vector<8x128xf32>
    %188 = arith.mulf %3, %187 : vector<8x128xf32>
    %189 = arith.addf %185, %188 : vector<8x128xf32>
    %c5_110 = arith.constant 5 : index
    %c2_111 = arith.constant 2 : index
    %190 = memref.load %arg2[%c5_110, %c2_111] : memref<16x3xf32, #tpu.memory_space<smem>>
    %191 = vector.broadcast %190 : f32 to vector<8x128xf32>
    %192 = arith.mulf %5, %191 : vector<8x128xf32>
    %193 = arith.addf %189, %192 : vector<8x128xf32>
    %c5_112 = arith.constant 5 : index
    %c0_113 = arith.constant 0 : index
    %194 = memref.load %arg2[%c5_112, %c0_113] : memref<16x3xf32, #tpu.memory_space<smem>>
    %195 = vector.broadcast %194 : f32 to vector<8x128xf32>
    %196 = arith.mulf %3, %195 : vector<8x128xf32>
    %c5_114 = arith.constant 5 : index
    %c1_115 = arith.constant 1 : index
    %197 = memref.load %arg2[%c5_114, %c1_115] : memref<16x3xf32, #tpu.memory_space<smem>>
    %198 = vector.broadcast %197 : f32 to vector<8x128xf32>
    %199 = arith.mulf %5, %198 : vector<8x128xf32>
    %200 = arith.addf %196, %199 : vector<8x128xf32>
    %c5_116 = arith.constant 5 : index
    %c2_117 = arith.constant 2 : index
    %201 = memref.load %arg2[%c5_116, %c2_117] : memref<16x3xf32, #tpu.memory_space<smem>>
    %202 = vector.broadcast %201 : f32 to vector<8x128xf32>
    %203 = arith.mulf %7, %202 : vector<8x128xf32>
    %204 = arith.addf %200, %203 : vector<8x128xf32>
    %205 = arith.maximumf %193, %204 : vector<8x128xf32>
    %c0_118 = arith.constant 0 : index
    %c5_119 = arith.constant 5 : index
    %206 = memref.load %arg3[%c0_118, %c5_119] : memref<3x16xf32, #tpu.memory_space<smem>>
    %207 = vector.broadcast %206 : f32 to vector<8x128xf32>
    %208 = arith.addf %205, %207 : vector<8x128xf32>
    %cst_120 = arith.constant 0.000000e+00 : f32
    %209 = vector.broadcast %cst_120 : f32 to vector<8x128xf32>
    %210 = arith.maximumf %208, %209 : vector<8x128xf32>
    %c1_121 = arith.constant 1 : index
    %c5_122 = arith.constant 5 : index
    %211 = memref.load %arg3[%c1_121, %c5_122] : memref<3x16xf32, #tpu.memory_space<smem>>
    %212 = vector.broadcast %211 : f32 to vector<8x128xf32>
    %213 = arith.mulf %210, %212 : vector<8x128xf32>
    %c2_123 = arith.constant 2 : index
    %c5_124 = arith.constant 5 : index
    %214 = memref.load %arg3[%c2_123, %c5_124] : memref<3x16xf32, #tpu.memory_space<smem>>
    %215 = vector.broadcast %214 : f32 to vector<8x128xf32>
    %216 = arith.addf %213, %215 : vector<8x128xf32>
    %c0_125 = arith.constant 0 : index
    %c640 = arith.constant 640 : index
    %217 = vector.load %arg4[%c0_125, %c640] : memref<8x2048xf32, #tpu.memory_space<vmem>>, vector<8x128xf32>
    tpu.vector_store %arg4[%c0_125, %c640], %216 {strides = array<i32>} : memref<8x2048xf32, #tpu.memory_space<vmem>>, vector<8x128xf32>,
    %c6 = arith.constant 6 : index
    %c0_126 = arith.constant 0 : index
    %218 = memref.load %arg2[%c6, %c0_126] : memref<16x3xf32, #tpu.memory_space<smem>>
    %219 = vector.broadcast %218 : f32 to vector<8x128xf32>
    %220 = arith.mulf %1, %219 : vector<8x128xf32>
    %c6_127 = arith.constant 6 : index
    %c1_128 = arith.constant 1 : index
    %221 = memref.load %arg2[%c6_127, %c1_128] : memref<16x3xf32, #tpu.memory_space<smem>>
    %222 = vector.broadcast %221 : f32 to vector<8x128xf32>
    %223 = arith.mulf %3, %222 : vector<8x128xf32>
    %224 = arith.addf %220, %223 : vector<8x128xf32>
    %c6_129 = arith.constant 6 : index
    %c2_130 = arith.constant 2 : index
    %225 = memref.load %arg2[%c6_129, %c2_130] : memref<16x3xf32, #tpu.memory_space<smem>>
    %226 = vector.broadcast %225 : f32 to vector<8x128xf32>
    %227 = arith.mulf %5, %226 : vector<8x128xf32>
    %228 = arith.addf %224, %227 : vector<8x128xf32>
    %c6_131 = arith.constant 6 : index
    %c0_132 = arith.constant 0 : index
    %229 = memref.load %arg2[%c6_131, %c0_132] : memref<16x3xf32, #tpu.memory_space<smem>>
    %230 = vector.broadcast %229 : f32 to vector<8x128xf32>
    %231 = arith.mulf %3, %230 : vector<8x128xf32>
    %c6_133 = arith.constant 6 : index
    %c1_134 = arith.constant 1 : index
    %232 = memref.load %arg2[%c6_133, %c1_134] : memref<16x3xf32, #tpu.memory_space<smem>>
    %233 = vector.broadcast %232 : f32 to vector<8x128xf32>
    %234 = arith.mulf %5, %233 : vector<8x128xf32>
    %235 = arith.addf %231, %234 : vector<8x128xf32>
    %c6_135 = arith.constant 6 : index
    %c2_136 = arith.constant 2 : index
    %236 = memref.load %arg2[%c6_135, %c2_136] : memref<16x3xf32, #tpu.memory_space<smem>>
    %237 = vector.broadcast %236 : f32 to vector<8x128xf32>
    %238 = arith.mulf %7, %237 : vector<8x128xf32>
    %239 = arith.addf %235, %238 : vector<8x128xf32>
    %240 = arith.maximumf %228, %239 : vector<8x128xf32>
    %c0_137 = arith.constant 0 : index
    %c6_138 = arith.constant 6 : index
    %241 = memref.load %arg3[%c0_137, %c6_138] : memref<3x16xf32, #tpu.memory_space<smem>>
    %242 = vector.broadcast %241 : f32 to vector<8x128xf32>
    %243 = arith.addf %240, %242 : vector<8x128xf32>
    %cst_139 = arith.constant 0.000000e+00 : f32
    %244 = vector.broadcast %cst_139 : f32 to vector<8x128xf32>
    %245 = arith.maximumf %243, %244 : vector<8x128xf32>
    %c1_140 = arith.constant 1 : index
    %c6_141 = arith.constant 6 : index
    %246 = memref.load %arg3[%c1_140, %c6_141] : memref<3x16xf32, #tpu.memory_space<smem>>
    %247 = vector.broadcast %246 : f32 to vector<8x128xf32>
    %248 = arith.mulf %245, %247 : vector<8x128xf32>
    %c2_142 = arith.constant 2 : index
    %c6_143 = arith.constant 6 : index
    %249 = memref.load %arg3[%c2_142, %c6_143] : memref<3x16xf32, #tpu.memory_space<smem>>
    %250 = vector.broadcast %249 : f32 to vector<8x128xf32>
    %251 = arith.addf %248, %250 : vector<8x128xf32>
    %c0_144 = arith.constant 0 : index
    %c768 = arith.constant 768 : index
    %252 = vector.load %arg4[%c0_144, %c768] : memref<8x2048xf32, #tpu.memory_space<vmem>>, vector<8x128xf32>
    tpu.vector_store %arg4[%c0_144, %c768], %251 {strides = array<i32>} : memref<8x2048xf32, #tpu.memory_space<vmem>>, vector<8x128xf32>,
    %c7 = arith.constant 7 : index
    %c0_145 = arith.constant 0 : index
    %253 = memref.load %arg2[%c7, %c0_145] : memref<16x3xf32, #tpu.memory_space<smem>>
    %254 = vector.broadcast %253 : f32 to vector<8x128xf32>
    %255 = arith.mulf %1, %254 : vector<8x128xf32>
    %c7_146 = arith.constant 7 : index
    %c1_147 = arith.constant 1 : index
    %256 = memref.load %arg2[%c7_146, %c1_147] : memref<16x3xf32, #tpu.memory_space<smem>>
    %257 = vector.broadcast %256 : f32 to vector<8x128xf32>
    %258 = arith.mulf %3, %257 : vector<8x128xf32>
    %259 = arith.addf %255, %258 : vector<8x128xf32>
    %c7_148 = arith.constant 7 : index
    %c2_149 = arith.constant 2 : index
    %260 = memref.load %arg2[%c7_148, %c2_149] : memref<16x3xf32, #tpu.memory_space<smem>>
    %261 = vector.broadcast %260 : f32 to vector<8x128xf32>
    %262 = arith.mulf %5, %261 : vector<8x128xf32>
    %263 = arith.addf %259, %262 : vector<8x128xf32>
    %c7_150 = arith.constant 7 : index
    %c0_151 = arith.constant 0 : index
    %264 = memref.load %arg2[%c7_150, %c0_151] : memref<16x3xf32, #tpu.memory_space<smem>>
    %265 = vector.broadcast %264 : f32 to vector<8x128xf32>
    %266 = arith.mulf %3, %265 : vector<8x128xf32>
    %c7_152 = arith.constant 7 : index
    %c1_153 = arith.constant 1 : index
    %267 = memref.load %arg2[%c7_152, %c1_153] : memref<16x3xf32, #tpu.memory_space<smem>>
    %268 = vector.broadcast %267 : f32 to vector<8x128xf32>
    %269 = arith.mulf %5, %268 : vector<8x128xf32>
    %270 = arith.addf %266, %269 : vector<8x128xf32>
    %c7_154 = arith.constant 7 : index
    %c2_155 = arith.constant 2 : index
    %271 = memref.load %arg2[%c7_154, %c2_155] : memref<16x3xf32, #tpu.memory_space<smem>>
    %272 = vector.broadcast %271 : f32 to vector<8x128xf32>
    %273 = arith.mulf %7, %272 : vector<8x128xf32>
    %274 = arith.addf %270, %273 : vector<8x128xf32>
    %275 = arith.maximumf %263, %274 : vector<8x128xf32>
    %c0_156 = arith.constant 0 : index
    %c7_157 = arith.constant 7 : index
    %276 = memref.load %arg3[%c0_156, %c7_157] : memref<3x16xf32, #tpu.memory_space<smem>>
    %277 = vector.broadcast %276 : f32 to vector<8x128xf32>
    %278 = arith.addf %275, %277 : vector<8x128xf32>
    %cst_158 = arith.constant 0.000000e+00 : f32
    %279 = vector.broadcast %cst_158 : f32 to vector<8x128xf32>
    %280 = arith.maximumf %278, %279 : vector<8x128xf32>
    %c1_159 = arith.constant 1 : index
    %c7_160 = arith.constant 7 : index
    %281 = memref.load %arg3[%c1_159, %c7_160] : memref<3x16xf32, #tpu.memory_space<smem>>
    %282 = vector.broadcast %281 : f32 to vector<8x128xf32>
    %283 = arith.mulf %280, %282 : vector<8x128xf32>
    %c2_161 = arith.constant 2 : index
    %c7_162 = arith.constant 7 : index
    %284 = memref.load %arg3[%c2_161, %c7_162] : memref<3x16xf32, #tpu.memory_space<smem>>
    %285 = vector.broadcast %284 : f32 to vector<8x128xf32>
    %286 = arith.addf %283, %285 : vector<8x128xf32>
    %c0_163 = arith.constant 0 : index
    %c896 = arith.constant 896 : index
    %287 = vector.load %arg4[%c0_163, %c896] : memref<8x2048xf32, #tpu.memory_space<vmem>>, vector<8x128xf32>
    tpu.vector_store %arg4[%c0_163, %c896], %286 {strides = array<i32>} : memref<8x2048xf32, #tpu.memory_space<vmem>>, vector<8x128xf32>,
    %c8 = arith.constant 8 : index
    %c0_164 = arith.constant 0 : index
    %288 = memref.load %arg2[%c8, %c0_164] : memref<16x3xf32, #tpu.memory_space<smem>>
    %289 = vector.broadcast %288 : f32 to vector<8x128xf32>
    %290 = arith.mulf %1, %289 : vector<8x128xf32>
    %c8_165 = arith.constant 8 : index
    %c1_166 = arith.constant 1 : index
    %291 = memref.load %arg2[%c8_165, %c1_166] : memref<16x3xf32, #tpu.memory_space<smem>>
    %292 = vector.broadcast %291 : f32 to vector<8x128xf32>
    %293 = arith.mulf %3, %292 : vector<8x128xf32>
    %294 = arith.addf %290, %293 : vector<8x128xf32>
    %c8_167 = arith.constant 8 : index
    %c2_168 = arith.constant 2 : index
    %295 = memref.load %arg2[%c8_167, %c2_168] : memref<16x3xf32, #tpu.memory_space<smem>>
    %296 = vector.broadcast %295 : f32 to vector<8x128xf32>
    %297 = arith.mulf %5, %296 : vector<8x128xf32>
    %298 = arith.addf %294, %297 : vector<8x128xf32>
    %c8_169 = arith.constant 8 : index
    %c0_170 = arith.constant 0 : index
    %299 = memref.load %arg2[%c8_169, %c0_170] : memref<16x3xf32, #tpu.memory_space<smem>>
    %300 = vector.broadcast %299 : f32 to vector<8x128xf32>
    %301 = arith.mulf %3, %300 : vector<8x128xf32>
    %c8_171 = arith.constant 8 : index
    %c1_172 = arith.constant 1 : index
    %302 = memref.load %arg2[%c8_171, %c1_172] : memref<16x3xf32, #tpu.memory_space<smem>>
    %303 = vector.broadcast %302 : f32 to vector<8x128xf32>
    %304 = arith.mulf %5, %303 : vector<8x128xf32>
    %305 = arith.addf %301, %304 : vector<8x128xf32>
    %c8_173 = arith.constant 8 : index
    %c2_174 = arith.constant 2 : index
    %306 = memref.load %arg2[%c8_173, %c2_174] : memref<16x3xf32, #tpu.memory_space<smem>>
    %307 = vector.broadcast %306 : f32 to vector<8x128xf32>
    %308 = arith.mulf %7, %307 : vector<8x128xf32>
    %309 = arith.addf %305, %308 : vector<8x128xf32>
    %310 = arith.maximumf %298, %309 : vector<8x128xf32>
    %c0_175 = arith.constant 0 : index
    %c8_176 = arith.constant 8 : index
    %311 = memref.load %arg3[%c0_175, %c8_176] : memref<3x16xf32, #tpu.memory_space<smem>>
    %312 = vector.broadcast %311 : f32 to vector<8x128xf32>
    %313 = arith.addf %310, %312 : vector<8x128xf32>
    %cst_177 = arith.constant 0.000000e+00 : f32
    %314 = vector.broadcast %cst_177 : f32 to vector<8x128xf32>
    %315 = arith.maximumf %313, %314 : vector<8x128xf32>
    %c1_178 = arith.constant 1 : index
    %c8_179 = arith.constant 8 : index
    %316 = memref.load %arg3[%c1_178, %c8_179] : memref<3x16xf32, #tpu.memory_space<smem>>
    %317 = vector.broadcast %316 : f32 to vector<8x128xf32>
    %318 = arith.mulf %315, %317 : vector<8x128xf32>
    %c2_180 = arith.constant 2 : index
    %c8_181 = arith.constant 8 : index
    %319 = memref.load %arg3[%c2_180, %c8_181] : memref<3x16xf32, #tpu.memory_space<smem>>
    %320 = vector.broadcast %319 : f32 to vector<8x128xf32>
    %321 = arith.addf %318, %320 : vector<8x128xf32>
    %c0_182 = arith.constant 0 : index
    %c1024 = arith.constant 1024 : index
    %322 = vector.load %arg4[%c0_182, %c1024] : memref<8x2048xf32, #tpu.memory_space<vmem>>, vector<8x128xf32>
    tpu.vector_store %arg4[%c0_182, %c1024], %321 {strides = array<i32>} : memref<8x2048xf32, #tpu.memory_space<vmem>>, vector<8x128xf32>,
    %c9 = arith.constant 9 : index
    %c0_183 = arith.constant 0 : index
    %323 = memref.load %arg2[%c9, %c0_183] : memref<16x3xf32, #tpu.memory_space<smem>>
    %324 = vector.broadcast %323 : f32 to vector<8x128xf32>
    %325 = arith.mulf %1, %324 : vector<8x128xf32>
    %c9_184 = arith.constant 9 : index
    %c1_185 = arith.constant 1 : index
    %326 = memref.load %arg2[%c9_184, %c1_185] : memref<16x3xf32, #tpu.memory_space<smem>>
    %327 = vector.broadcast %326 : f32 to vector<8x128xf32>
    %328 = arith.mulf %3, %327 : vector<8x128xf32>
    %329 = arith.addf %325, %328 : vector<8x128xf32>
    %c9_186 = arith.constant 9 : index
    %c2_187 = arith.constant 2 : index
    %330 = memref.load %arg2[%c9_186, %c2_187] : memref<16x3xf32, #tpu.memory_space<smem>>
    %331 = vector.broadcast %330 : f32 to vector<8x128xf32>
    %332 = arith.mulf %5, %331 : vector<8x128xf32>
    %333 = arith.addf %329, %332 : vector<8x128xf32>
    %c9_188 = arith.constant 9 : index
    %c0_189 = arith.constant 0 : index
    %334 = memref.load %arg2[%c9_188, %c0_189] : memref<16x3xf32, #tpu.memory_space<smem>>
    %335 = vector.broadcast %334 : f32 to vector<8x128xf32>
    %336 = arith.mulf %3, %335 : vector<8x128xf32>
    %c9_190 = arith.constant 9 : index
    %c1_191 = arith.constant 1 : index
    %337 = memref.load %arg2[%c9_190, %c1_191] : memref<16x3xf32, #tpu.memory_space<smem>>
    %338 = vector.broadcast %337 : f32 to vector<8x128xf32>
    %339 = arith.mulf %5, %338 : vector<8x128xf32>
    %340 = arith.addf %336, %339 : vector<8x128xf32>
    %c9_192 = arith.constant 9 : index
    %c2_193 = arith.constant 2 : index
    %341 = memref.load %arg2[%c9_192, %c2_193] : memref<16x3xf32, #tpu.memory_space<smem>>
    %342 = vector.broadcast %341 : f32 to vector<8x128xf32>
    %343 = arith.mulf %7, %342 : vector<8x128xf32>
    %344 = arith.addf %340, %343 : vector<8x128xf32>
    %345 = arith.maximumf %333, %344 : vector<8x128xf32>
    %c0_194 = arith.constant 0 : index
    %c9_195 = arith.constant 9 : index
    %346 = memref.load %arg3[%c0_194, %c9_195] : memref<3x16xf32, #tpu.memory_space<smem>>
    %347 = vector.broadcast %346 : f32 to vector<8x128xf32>
    %348 = arith.addf %345, %347 : vector<8x128xf32>
    %cst_196 = arith.constant 0.000000e+00 : f32
    %349 = vector.broadcast %cst_196 : f32 to vector<8x128xf32>
    %350 = arith.maximumf %348, %349 : vector<8x128xf32>
    %c1_197 = arith.constant 1 : index
    %c9_198 = arith.constant 9 : index
    %351 = memref.load %arg3[%c1_197, %c9_198] : memref<3x16xf32, #tpu.memory_space<smem>>
    %352 = vector.broadcast %351 : f32 to vector<8x128xf32>
    %353 = arith.mulf %350, %352 : vector<8x128xf32>
    %c2_199 = arith.constant 2 : index
    %c9_200 = arith.constant 9 : index
    %354 = memref.load %arg3[%c2_199, %c9_200] : memref<3x16xf32, #tpu.memory_space<smem>>
    %355 = vector.broadcast %354 : f32 to vector<8x128xf32>
    %356 = arith.addf %353, %355 : vector<8x128xf32>
    %c0_201 = arith.constant 0 : index
    %c1152 = arith.constant 1152 : index
    %357 = vector.load %arg4[%c0_201, %c1152] : memref<8x2048xf32, #tpu.memory_space<vmem>>, vector<8x128xf32>
    tpu.vector_store %arg4[%c0_201, %c1152], %356 {strides = array<i32>} : memref<8x2048xf32, #tpu.memory_space<vmem>>, vector<8x128xf32>,
    %c10 = arith.constant 10 : index
    %c0_202 = arith.constant 0 : index
    %358 = memref.load %arg2[%c10, %c0_202] : memref<16x3xf32, #tpu.memory_space<smem>>
    %359 = vector.broadcast %358 : f32 to vector<8x128xf32>
    %360 = arith.mulf %1, %359 : vector<8x128xf32>
    %c10_203 = arith.constant 10 : index
    %c1_204 = arith.constant 1 : index
    %361 = memref.load %arg2[%c10_203, %c1_204] : memref<16x3xf32, #tpu.memory_space<smem>>
    %362 = vector.broadcast %361 : f32 to vector<8x128xf32>
    %363 = arith.mulf %3, %362 : vector<8x128xf32>
    %364 = arith.addf %360, %363 : vector<8x128xf32>
    %c10_205 = arith.constant 10 : index
    %c2_206 = arith.constant 2 : index
    %365 = memref.load %arg2[%c10_205, %c2_206] : memref<16x3xf32, #tpu.memory_space<smem>>
    %366 = vector.broadcast %365 : f32 to vector<8x128xf32>
    %367 = arith.mulf %5, %366 : vector<8x128xf32>
    %368 = arith.addf %364, %367 : vector<8x128xf32>
    %c10_207 = arith.constant 10 : index
    %c0_208 = arith.constant 0 : index
    %369 = memref.load %arg2[%c10_207, %c0_208] : memref<16x3xf32, #tpu.memory_space<smem>>
    %370 = vector.broadcast %369 : f32 to vector<8x128xf32>
    %371 = arith.mulf %3, %370 : vector<8x128xf32>
    %c10_209 = arith.constant 10 : index
    %c1_210 = arith.constant 1 : index
    %372 = memref.load %arg2[%c10_209, %c1_210] : memref<16x3xf32, #tpu.memory_space<smem>>
    %373 = vector.broadcast %372 : f32 to vector<8x128xf32>
    %374 = arith.mulf %5, %373 : vector<8x128xf32>
    %375 = arith.addf %371, %374 : vector<8x128xf32>
    %c10_211 = arith.constant 10 : index
    %c2_212 = arith.constant 2 : index
    %376 = memref.load %arg2[%c10_211, %c2_212] : memref<16x3xf32, #tpu.memory_space<smem>>
    %377 = vector.broadcast %376 : f32 to vector<8x128xf32>
    %378 = arith.mulf %7, %377 : vector<8x128xf32>
    %379 = arith.addf %375, %378 : vector<8x128xf32>
    %380 = arith.maximumf %368, %379 : vector<8x128xf32>
    %c0_213 = arith.constant 0 : index
    %c10_214 = arith.constant 10 : index
    %381 = memref.load %arg3[%c0_213, %c10_214] : memref<3x16xf32, #tpu.memory_space<smem>>
    %382 = vector.broadcast %381 : f32 to vector<8x128xf32>
    %383 = arith.addf %380, %382 : vector<8x128xf32>
    %cst_215 = arith.constant 0.000000e+00 : f32
    %384 = vector.broadcast %cst_215 : f32 to vector<8x128xf32>
    %385 = arith.maximumf %383, %384 : vector<8x128xf32>
    %c1_216 = arith.constant 1 : index
    %c10_217 = arith.constant 10 : index
    %386 = memref.load %arg3[%c1_216, %c10_217] : memref<3x16xf32, #tpu.memory_space<smem>>
    %387 = vector.broadcast %386 : f32 to vector<8x128xf32>
    %388 = arith.mulf %385, %387 : vector<8x128xf32>
    %c2_218 = arith.constant 2 : index
    %c10_219 = arith.constant 10 : index
    %389 = memref.load %arg3[%c2_218, %c10_219] : memref<3x16xf32, #tpu.memory_space<smem>>
    %390 = vector.broadcast %389 : f32 to vector<8x128xf32>
    %391 = arith.addf %388, %390 : vector<8x128xf32>
    %c0_220 = arith.constant 0 : index
    %c1280 = arith.constant 1280 : index
    %392 = vector.load %arg4[%c0_220, %c1280] : memref<8x2048xf32, #tpu.memory_space<vmem>>, vector<8x128xf32>
    tpu.vector_store %arg4[%c0_220, %c1280], %391 {strides = array<i32>} : memref<8x2048xf32, #tpu.memory_space<vmem>>, vector<8x128xf32>,
    %c11 = arith.constant 11 : index
    %c0_221 = arith.constant 0 : index
    %393 = memref.load %arg2[%c11, %c0_221] : memref<16x3xf32, #tpu.memory_space<smem>>
    %394 = vector.broadcast %393 : f32 to vector<8x128xf32>
    %395 = arith.mulf %1, %394 : vector<8x128xf32>
    %c11_222 = arith.constant 11 : index
    %c1_223 = arith.constant 1 : index
    %396 = memref.load %arg2[%c11_222, %c1_223] : memref<16x3xf32, #tpu.memory_space<smem>>
    %397 = vector.broadcast %396 : f32 to vector<8x128xf32>
    %398 = arith.mulf %3, %397 : vector<8x128xf32>
    %399 = arith.addf %395, %398 : vector<8x128xf32>
    %c11_224 = arith.constant 11 : index
    %c2_225 = arith.constant 2 : index
    %400 = memref.load %arg2[%c11_224, %c2_225] : memref<16x3xf32, #tpu.memory_space<smem>>
    %401 = vector.broadcast %400 : f32 to vector<8x128xf32>
    %402 = arith.mulf %5, %401 : vector<8x128xf32>
    %403 = arith.addf %399, %402 : vector<8x128xf32>
    %c11_226 = arith.constant 11 : index
    %c0_227 = arith.constant 0 : index
    %404 = memref.load %arg2[%c11_226, %c0_227] : memref<16x3xf32, #tpu.memory_space<smem>>
    %405 = vector.broadcast %404 : f32 to vector<8x128xf32>
    %406 = arith.mulf %3, %405 : vector<8x128xf32>
    %c11_228 = arith.constant 11 : index
    %c1_229 = arith.constant 1 : index
    %407 = memref.load %arg2[%c11_228, %c1_229] : memref<16x3xf32, #tpu.memory_space<smem>>
    %408 = vector.broadcast %407 : f32 to vector<8x128xf32>
    %409 = arith.mulf %5, %408 : vector<8x128xf32>
    %410 = arith.addf %406, %409 : vector<8x128xf32>
    %c11_230 = arith.constant 11 : index
    %c2_231 = arith.constant 2 : index
    %411 = memref.load %arg2[%c11_230, %c2_231] : memref<16x3xf32, #tpu.memory_space<smem>>
    %412 = vector.broadcast %411 : f32 to vector<8x128xf32>
    %413 = arith.mulf %7, %412 : vector<8x128xf32>
    %414 = arith.addf %410, %413 : vector<8x128xf32>
    %415 = arith.maximumf %403, %414 : vector<8x128xf32>
    %c0_232 = arith.constant 0 : index
    %c11_233 = arith.constant 11 : index
    %416 = memref.load %arg3[%c0_232, %c11_233] : memref<3x16xf32, #tpu.memory_space<smem>>
    %417 = vector.broadcast %416 : f32 to vector<8x128xf32>
    %418 = arith.addf %415, %417 : vector<8x128xf32>
    %cst_234 = arith.constant 0.000000e+00 : f32
    %419 = vector.broadcast %cst_234 : f32 to vector<8x128xf32>
    %420 = arith.maximumf %418, %419 : vector<8x128xf32>
    %c1_235 = arith.constant 1 : index
    %c11_236 = arith.constant 11 : index
    %421 = memref.load %arg3[%c1_235, %c11_236] : memref<3x16xf32, #tpu.memory_space<smem>>
    %422 = vector.broadcast %421 : f32 to vector<8x128xf32>
    %423 = arith.mulf %420, %422 : vector<8x128xf32>
    %c2_237 = arith.constant 2 : index
    %c11_238 = arith.constant 11 : index
    %424 = memref.load %arg3[%c2_237, %c11_238] : memref<3x16xf32, #tpu.memory_space<smem>>
    %425 = vector.broadcast %424 : f32 to vector<8x128xf32>
    %426 = arith.addf %423, %425 : vector<8x128xf32>
    %c0_239 = arith.constant 0 : index
    %c1408 = arith.constant 1408 : index
    %427 = vector.load %arg4[%c0_239, %c1408] : memref<8x2048xf32, #tpu.memory_space<vmem>>, vector<8x128xf32>
    tpu.vector_store %arg4[%c0_239, %c1408], %426 {strides = array<i32>} : memref<8x2048xf32, #tpu.memory_space<vmem>>, vector<8x128xf32>,
    %c12 = arith.constant 12 : index
    %c0_240 = arith.constant 0 : index
    %428 = memref.load %arg2[%c12, %c0_240] : memref<16x3xf32, #tpu.memory_space<smem>>
    %429 = vector.broadcast %428 : f32 to vector<8x128xf32>
    %430 = arith.mulf %1, %429 : vector<8x128xf32>
    %c12_241 = arith.constant 12 : index
    %c1_242 = arith.constant 1 : index
    %431 = memref.load %arg2[%c12_241, %c1_242] : memref<16x3xf32, #tpu.memory_space<smem>>
    %432 = vector.broadcast %431 : f32 to vector<8x128xf32>
    %433 = arith.mulf %3, %432 : vector<8x128xf32>
    %434 = arith.addf %430, %433 : vector<8x128xf32>
    %c12_243 = arith.constant 12 : index
    %c2_244 = arith.constant 2 : index
    %435 = memref.load %arg2[%c12_243, %c2_244] : memref<16x3xf32, #tpu.memory_space<smem>>
    %436 = vector.broadcast %435 : f32 to vector<8x128xf32>
    %437 = arith.mulf %5, %436 : vector<8x128xf32>
    %438 = arith.addf %434, %437 : vector<8x128xf32>
    %c12_245 = arith.constant 12 : index
    %c0_246 = arith.constant 0 : index
    %439 = memref.load %arg2[%c12_245, %c0_246] : memref<16x3xf32, #tpu.memory_space<smem>>
    %440 = vector.broadcast %439 : f32 to vector<8x128xf32>
    %441 = arith.mulf %3, %440 : vector<8x128xf32>
    %c12_247 = arith.constant 12 : index
    %c1_248 = arith.constant 1 : index
    %442 = memref.load %arg2[%c12_247, %c1_248] : memref<16x3xf32, #tpu.memory_space<smem>>
    %443 = vector.broadcast %442 : f32 to vector<8x128xf32>
    %444 = arith.mulf %5, %443 : vector<8x128xf32>
    %445 = arith.addf %441, %444 : vector<8x128xf32>
    %c12_249 = arith.constant 12 : index
    %c2_250 = arith.constant 2 : index
    %446 = memref.load %arg2[%c12_249, %c2_250] : memref<16x3xf32, #tpu.memory_space<smem>>
    %447 = vector.broadcast %446 : f32 to vector<8x128xf32>
    %448 = arith.mulf %7, %447 : vector<8x128xf32>
    %449 = arith.addf %445, %448 : vector<8x128xf32>
    %450 = arith.maximumf %438, %449 : vector<8x128xf32>
    %c0_251 = arith.constant 0 : index
    %c12_252 = arith.constant 12 : index
    %451 = memref.load %arg3[%c0_251, %c12_252] : memref<3x16xf32, #tpu.memory_space<smem>>
    %452 = vector.broadcast %451 : f32 to vector<8x128xf32>
    %453 = arith.addf %450, %452 : vector<8x128xf32>
    %cst_253 = arith.constant 0.000000e+00 : f32
    %454 = vector.broadcast %cst_253 : f32 to vector<8x128xf32>
    %455 = arith.maximumf %453, %454 : vector<8x128xf32>
    %c1_254 = arith.constant 1 : index
    %c12_255 = arith.constant 12 : index
    %456 = memref.load %arg3[%c1_254, %c12_255] : memref<3x16xf32, #tpu.memory_space<smem>>
    %457 = vector.broadcast %456 : f32 to vector<8x128xf32>
    %458 = arith.mulf %455, %457 : vector<8x128xf32>
    %c2_256 = arith.constant 2 : index
    %c12_257 = arith.constant 12 : index
    %459 = memref.load %arg3[%c2_256, %c12_257] : memref<3x16xf32, #tpu.memory_space<smem>>
    %460 = vector.broadcast %459 : f32 to vector<8x128xf32>
    %461 = arith.addf %458, %460 : vector<8x128xf32>
    %c0_258 = arith.constant 0 : index
    %c1536 = arith.constant 1536 : index
    %462 = vector.load %arg4[%c0_258, %c1536] : memref<8x2048xf32, #tpu.memory_space<vmem>>, vector<8x128xf32>
    tpu.vector_store %arg4[%c0_258, %c1536], %461 {strides = array<i32>} : memref<8x2048xf32, #tpu.memory_space<vmem>>, vector<8x128xf32>,
    %c13 = arith.constant 13 : index
    %c0_259 = arith.constant 0 : index
    %463 = memref.load %arg2[%c13, %c0_259] : memref<16x3xf32, #tpu.memory_space<smem>>
    %464 = vector.broadcast %463 : f32 to vector<8x128xf32>
    %465 = arith.mulf %1, %464 : vector<8x128xf32>
    %c13_260 = arith.constant 13 : index
    %c1_261 = arith.constant 1 : index
    %466 = memref.load %arg2[%c13_260, %c1_261] : memref<16x3xf32, #tpu.memory_space<smem>>
    %467 = vector.broadcast %466 : f32 to vector<8x128xf32>
    %468 = arith.mulf %3, %467 : vector<8x128xf32>
    %469 = arith.addf %465, %468 : vector<8x128xf32>
    %c13_262 = arith.constant 13 : index
    %c2_263 = arith.constant 2 : index
    %470 = memref.load %arg2[%c13_262, %c2_263] : memref<16x3xf32, #tpu.memory_space<smem>>
    %471 = vector.broadcast %470 : f32 to vector<8x128xf32>
    %472 = arith.mulf %5, %471 : vector<8x128xf32>
    %473 = arith.addf %469, %472 : vector<8x128xf32>
    %c13_264 = arith.constant 13 : index
    %c0_265 = arith.constant 0 : index
    %474 = memref.load %arg2[%c13_264, %c0_265] : memref<16x3xf32, #tpu.memory_space<smem>>
    %475 = vector.broadcast %474 : f32 to vector<8x128xf32>
    %476 = arith.mulf %3, %475 : vector<8x128xf32>
    %c13_266 = arith.constant 13 : index
    %c1_267 = arith.constant 1 : index
    %477 = memref.load %arg2[%c13_266, %c1_267] : memref<16x3xf32, #tpu.memory_space<smem>>
    %478 = vector.broadcast %477 : f32 to vector<8x128xf32>
    %479 = arith.mulf %5, %478 : vector<8x128xf32>
    %480 = arith.addf %476, %479 : vector<8x128xf32>
    %c13_268 = arith.constant 13 : index
    %c2_269 = arith.constant 2 : index
    %481 = memref.load %arg2[%c13_268, %c2_269] : memref<16x3xf32, #tpu.memory_space<smem>>
    %482 = vector.broadcast %481 : f32 to vector<8x128xf32>
    %483 = arith.mulf %7, %482 : vector<8x128xf32>
    %484 = arith.addf %480, %483 : vector<8x128xf32>
    %485 = arith.maximumf %473, %484 : vector<8x128xf32>
    %c0_270 = arith.constant 0 : index
    %c13_271 = arith.constant 13 : index
    %486 = memref.load %arg3[%c0_270, %c13_271] : memref<3x16xf32, #tpu.memory_space<smem>>
    %487 = vector.broadcast %486 : f32 to vector<8x128xf32>
    %488 = arith.addf %485, %487 : vector<8x128xf32>
    %cst_272 = arith.constant 0.000000e+00 : f32
    %489 = vector.broadcast %cst_272 : f32 to vector<8x128xf32>
    %490 = arith.maximumf %488, %489 : vector<8x128xf32>
    %c1_273 = arith.constant 1 : index
    %c13_274 = arith.constant 13 : index
    %491 = memref.load %arg3[%c1_273, %c13_274] : memref<3x16xf32, #tpu.memory_space<smem>>
    %492 = vector.broadcast %491 : f32 to vector<8x128xf32>
    %493 = arith.mulf %490, %492 : vector<8x128xf32>
    %c2_275 = arith.constant 2 : index
    %c13_276 = arith.constant 13 : index
    %494 = memref.load %arg3[%c2_275, %c13_276] : memref<3x16xf32, #tpu.memory_space<smem>>
    %495 = vector.broadcast %494 : f32 to vector<8x128xf32>
    %496 = arith.addf %493, %495 : vector<8x128xf32>
    %c0_277 = arith.constant 0 : index
    %c1664 = arith.constant 1664 : index
    %497 = vector.load %arg4[%c0_277, %c1664] : memref<8x2048xf32, #tpu.memory_space<vmem>>, vector<8x128xf32>
    tpu.vector_store %arg4[%c0_277, %c1664], %496 {strides = array<i32>} : memref<8x2048xf32, #tpu.memory_space<vmem>>, vector<8x128xf32>,
    %c14 = arith.constant 14 : index
    %c0_278 = arith.constant 0 : index
    %498 = memref.load %arg2[%c14, %c0_278] : memref<16x3xf32, #tpu.memory_space<smem>>
    %499 = vector.broadcast %498 : f32 to vector<8x128xf32>
    %500 = arith.mulf %1, %499 : vector<8x128xf32>
    %c14_279 = arith.constant 14 : index
    %c1_280 = arith.constant 1 : index
    %501 = memref.load %arg2[%c14_279, %c1_280] : memref<16x3xf32, #tpu.memory_space<smem>>
    %502 = vector.broadcast %501 : f32 to vector<8x128xf32>
    %503 = arith.mulf %3, %502 : vector<8x128xf32>
    %504 = arith.addf %500, %503 : vector<8x128xf32>
    %c14_281 = arith.constant 14 : index
    %c2_282 = arith.constant 2 : index
    %505 = memref.load %arg2[%c14_281, %c2_282] : memref<16x3xf32, #tpu.memory_space<smem>>
    %506 = vector.broadcast %505 : f32 to vector<8x128xf32>
    %507 = arith.mulf %5, %506 : vector<8x128xf32>
    %508 = arith.addf %504, %507 : vector<8x128xf32>
    %c14_283 = arith.constant 14 : index
    %c0_284 = arith.constant 0 : index
    %509 = memref.load %arg2[%c14_283, %c0_284] : memref<16x3xf32, #tpu.memory_space<smem>>
    %510 = vector.broadcast %509 : f32 to vector<8x128xf32>
    %511 = arith.mulf %3, %510 : vector<8x128xf32>
    %c14_285 = arith.constant 14 : index
    %c1_286 = arith.constant 1 : index
    %512 = memref.load %arg2[%c14_285, %c1_286] : memref<16x3xf32, #tpu.memory_space<smem>>
    %513 = vector.broadcast %512 : f32 to vector<8x128xf32>
    %514 = arith.mulf %5, %513 : vector<8x128xf32>
    %515 = arith.addf %511, %514 : vector<8x128xf32>
    %c14_287 = arith.constant 14 : index
    %c2_288 = arith.constant 2 : index
    %516 = memref.load %arg2[%c14_287, %c2_288] : memref<16x3xf32, #tpu.memory_space<smem>>
    %517 = vector.broadcast %516 : f32 to vector<8x128xf32>
    %518 = arith.mulf %7, %517 : vector<8x128xf32>
    %519 = arith.addf %515, %518 : vector<8x128xf32>
    %520 = arith.maximumf %508, %519 : vector<8x128xf32>
    %c0_289 = arith.constant 0 : index
    %c14_290 = arith.constant 14 : index
    %521 = memref.load %arg3[%c0_289, %c14_290] : memref<3x16xf32, #tpu.memory_space<smem>>
    %522 = vector.broadcast %521 : f32 to vector<8x128xf32>
    %523 = arith.addf %520, %522 : vector<8x128xf32>
    %cst_291 = arith.constant 0.000000e+00 : f32
    %524 = vector.broadcast %cst_291 : f32 to vector<8x128xf32>
    %525 = arith.maximumf %523, %524 : vector<8x128xf32>
    %c1_292 = arith.constant 1 : index
    %c14_293 = arith.constant 14 : index
    %526 = memref.load %arg3[%c1_292, %c14_293] : memref<3x16xf32, #tpu.memory_space<smem>>
    %527 = vector.broadcast %526 : f32 to vector<8x128xf32>
    %528 = arith.mulf %525, %527 : vector<8x128xf32>
    %c2_294 = arith.constant 2 : index
    %c14_295 = arith.constant 14 : index
    %529 = memref.load %arg3[%c2_294, %c14_295] : memref<3x16xf32, #tpu.memory_space<smem>>
    %530 = vector.broadcast %529 : f32 to vector<8x128xf32>
    %531 = arith.addf %528, %530 : vector<8x128xf32>
    %c0_296 = arith.constant 0 : index
    %c1792 = arith.constant 1792 : index
    %532 = vector.load %arg4[%c0_296, %c1792] : memref<8x2048xf32, #tpu.memory_space<vmem>>, vector<8x128xf32>
    tpu.vector_store %arg4[%c0_296, %c1792], %531 {strides = array<i32>} : memref<8x2048xf32, #tpu.memory_space<vmem>>, vector<8x128xf32>,
    %c15 = arith.constant 15 : index
    %c0_297 = arith.constant 0 : index
    %533 = memref.load %arg2[%c15, %c0_297] : memref<16x3xf32, #tpu.memory_space<smem>>
    %534 = vector.broadcast %533 : f32 to vector<8x128xf32>
    %535 = arith.mulf %1, %534 : vector<8x128xf32>
    %c15_298 = arith.constant 15 : index
    %c1_299 = arith.constant 1 : index
    %536 = memref.load %arg2[%c15_298, %c1_299] : memref<16x3xf32, #tpu.memory_space<smem>>
    %537 = vector.broadcast %536 : f32 to vector<8x128xf32>
    %538 = arith.mulf %3, %537 : vector<8x128xf32>
    %539 = arith.addf %535, %538 : vector<8x128xf32>
    %c15_300 = arith.constant 15 : index
    %c2_301 = arith.constant 2 : index
    %540 = memref.load %arg2[%c15_300, %c2_301] : memref<16x3xf32, #tpu.memory_space<smem>>
    %541 = vector.broadcast %540 : f32 to vector<8x128xf32>
    %542 = arith.mulf %5, %541 : vector<8x128xf32>
    %543 = arith.addf %539, %542 : vector<8x128xf32>
    %c15_302 = arith.constant 15 : index
    %c0_303 = arith.constant 0 : index
    %544 = memref.load %arg2[%c15_302, %c0_303] : memref<16x3xf32, #tpu.memory_space<smem>>
    %545 = vector.broadcast %544 : f32 to vector<8x128xf32>
    %546 = arith.mulf %3, %545 : vector<8x128xf32>
    %c15_304 = arith.constant 15 : index
    %c1_305 = arith.constant 1 : index
    %547 = memref.load %arg2[%c15_304, %c1_305] : memref<16x3xf32, #tpu.memory_space<smem>>
    %548 = vector.broadcast %547 : f32 to vector<8x128xf32>
    %549 = arith.mulf %5, %548 : vector<8x128xf32>
    %550 = arith.addf %546, %549 : vector<8x128xf32>
    %c15_306 = arith.constant 15 : index
    %c2_307 = arith.constant 2 : index
    %551 = memref.load %arg2[%c15_306, %c2_307] : memref<16x3xf32, #tpu.memory_space<smem>>
    %552 = vector.broadcast %551 : f32 to vector<8x128xf32>
    %553 = arith.mulf %7, %552 : vector<8x128xf32>
    %554 = arith.addf %550, %553 : vector<8x128xf32>
    %555 = arith.maximumf %543, %554 : vector<8x128xf32>
    %c0_308 = arith.constant 0 : index
    %c15_309 = arith.constant 15 : index
    %556 = memref.load %arg3[%c0_308, %c15_309] : memref<3x16xf32, #tpu.memory_space<smem>>
    %557 = vector.broadcast %556 : f32 to vector<8x128xf32>
    %558 = arith.addf %555, %557 : vector<8x128xf32>
    %cst_310 = arith.constant 0.000000e+00 : f32
    %559 = vector.broadcast %cst_310 : f32 to vector<8x128xf32>
    %560 = arith.maximumf %558, %559 : vector<8x128xf32>
    %c1_311 = arith.constant 1 : index
    %c15_312 = arith.constant 15 : index
    %561 = memref.load %arg3[%c1_311, %c15_312] : memref<3x16xf32, #tpu.memory_space<smem>>
    %562 = vector.broadcast %561 : f32 to vector<8x128xf32>
    %563 = arith.mulf %560, %562 : vector<8x128xf32>
    %c2_313 = arith.constant 2 : index
    %c15_314 = arith.constant 15 : index
    %564 = memref.load %arg3[%c2_313, %c15_314] : memref<3x16xf32, #tpu.memory_space<smem>>
    %565 = vector.broadcast %564 : f32 to vector<8x128xf32>
    %566 = arith.addf %563, %565 : vector<8x128xf32>
    %c0_315 = arith.constant 0 : index
    %c1920 = arith.constant 1920 : index
    %567 = vector.load %arg4[%c0_315, %c1920] : memref<8x2048xf32, #tpu.memory_space<vmem>>, vector<8x128xf32>
    tpu.vector_store %arg4[%c0_315, %c1920], %566 {strides = array<i32>} : memref<8x2048xf32, #tpu.memory_space<vmem>>, vector<8x128xf32>,
    return
  }
  func.func @transform_0(%arg0: i32) -> (i32, i32, i32) {
    %c0_i32 = arith.constant 0 : i32
    %c0_i32_0 = arith.constant 0 : i32
    %c0_i32_1 = arith.constant 0 : i32
    return %c0_i32, %arg0, %c0_i32_0 : i32, i32, i32
  }
  func.func @transform_1(%arg0: i32) -> (i32, i32) {
    %c0_i32 = arith.constant 0 : i32
    %c0_i32_0 = arith.constant 0 : i32
    %c0_i32_1 = arith.constant 0 : i32
    return %c0_i32, %c0_i32_0 : i32, i32
  }
  func.func @transform_2(%arg0: i32) -> (i32, i32) {
    %c0_i32 = arith.constant 0 : i32
    %c0_i32_0 = arith.constant 0 : i32
    %c0_i32_1 = arith.constant 0 : i32
    return %c0_i32, %c0_i32_0 : i32, i32
  }
  func.func @transform_3(%arg0: i32) -> (i32, i32) {
    %c0_i32 = arith.constant 0 : i32
    %c0_i32_0 = arith.constant 0 : i32
    return %arg0, %c0_i32 : i32, i32
  }
}

</mosaic_0001>

<llo_original>
// kernel: tpu_custom_call.1
$region0: #{tpu_custom_call.1}
  #allocation0 [shape = 'u32[]', space=smem, size = 0x4, offset = 0x4, fixed_abs, tag = 'smem constant byte address 0x4 - core index']
  #allocation1 [shape = 'u32[72,128]{1,0:T(1,128)}', space=vmem, size = 0x9000, scoped, tag = 'internal scratch']
  %s0 = inlined_call_operand.hbm [shape: f32[2,16,129], index: 0, kind: input, shape index: {}]
  %s1 = inlined_call_operand.vmem [shape: f32[16,3], index: 1, kind: input, shape index: {}]
  %s2 = inlined_call_operand.vmem [shape: f32[3,16], index: 2, kind: input, shape index: {}]
  %s3 = inlined_call_operand.hbm [shape: f32[16,2048], index: 3, kind: output, shape index: {}]
  %s4 = sld [smem:[#allocation0]]
  $region57: #{tpu_custom_call.1} parent=0
    _
  %s6 = ssub.s32 1, %s4
  %s7 = scalar_select 0, %s6, %s4
  $region1: #{tpu_custom_call.1} parent=0
    #allocation2 [shape = 'u8[32768]{0}', space=vmem, size = 0x8000, scoped, tag = 'input window, operand 0']
    #allocation3 [shape = 's32[2]{0}', space=sflag, size = 0x8, scoped, tag = 'scoped memory for tpu_custom_call.1']
    #allocation4 [shape = 's32[2]{0}', space=sflag, size = 0x8, scoped, tag = 'scoped memory for tpu_custom_call.1']
    #allocation5 [shape = 's32[2]{0}', space=sflag, size = 0x8, scoped, tag = 'scoped memory for tpu_custom_call.1']
    #allocation6 [shape = 'u8[8192]{0}', space=smem, size = 0x2000, scoped, tag = 'input window, operand 1, single buffered']
    #allocation7 [shape = 'u8[2048]{0}', space=smem, size = 0x800, scoped, tag = 'input window, operand 2, single buffered']
    #allocation8 [shape = 's32[1]{0}', space=sflag, size = 0x4, scoped, tag = 'scoped memory for tpu_custom_call.1']
    #allocation9 [shape = 'u8[131072]{0}', space=vmem, size = 0x20000, scoped, tag = 'output window, operand 0']
    %8 = vsyncpa [#allocation3], 0
    %s9 = scalar_lea.sflag [#allocation3], 1
    %10 = vsyncpa %s9, 0
    %11 = vsyncpa [#allocation5], 0
    %12 = vsyncpa [#allocation8], 0
    %13 = vsyncpa [#allocation4], 0
    %s14 = scalar_lea.sflag [#allocation4], 1
    %15 = vsyncpa %s14, 0
    loop: start=0, step=1, limit=4
    $region2: #{tpu_custom_call.1} parent=1 // loop_pre_header
      _
    $region3: #{tpu_custom_call.1} parent=1 // loop_header
      %s17 = sphi 0, %s21
      %p18 = scmp.ge.s32.totalorder %s17, 4
      %s27 = sphi 0, %s29
      %s30 = sphi 0, %s27
      %s31 = sphi 0, %s30
      %s47 = sphi 0, %s31
      %s51 = sphi 0, %s51
      %s53 = sphi 0, %s51
      %s54 = sphi 0, %s53
      %s68 = sphi 0, %s54
      %s72 = sphi 0, %s72
      %s74 = sphi 0, %s72
      %s75 = sphi 0, %s74
      %s89 = sphi 0, %s75
      %s95 = sphi 0, %s97
      %s98 = sphi 0, %s95
      %s99 = sphi 0, %s98
      %s115 = sphi 0, %s99
    $region4: #{tpu_custom_call.1} parent=1 // loop_header_branch
      %20 = sbr.rel (%p18) target = $region8
    $region5: #{tpu_custom_call.1} parent=1 // loop_body
      %s22 = ssub.s32 %s17, 1
      %s23 = ssub.s32 %s17, 2
      %s24 = sadd.s32 %s17, 1
      %s25 = ssub.s32 %s17, %s24
      %p26 = scmp.eq.s32.totalorder %s25, 0
      %s28 = sadd.s32 %s27, 1
      %s29 = scalar_select %p26, %s27, %s28
      %p32 = pneg %p26
      %p33 = scmp.eq.s32.totalorder %s17, 1
      %p34 = por %p32, %p33
      %p35 = scmp.ne.s32.totalorder %s27, %s30
      %p36 = scmp.eq.s32.totalorder %s17, 0
      %p37 = por %p35, %p36
      %p38 = scmp.ne.s32.totalorder %s27, %s30
      %p39 = scmp.eq.s32.totalorder %s22, 1
      %p40 = por %p38, %p39
      %p41 = scmp.ne.s32.totalorder %s30, %s31
      %p42 = scmp.eq.s32.totalorder %s22, 0
      %p43 = por %p41, %p42
      %p44 = scmp.ne.s32.totalorder %s30, %s31
      %p45 = scmp.eq.s32.totalorder %s23, 1
      %p46 = por %p44, %p45
      %p48 = scmp.ne.s32.totalorder %s31, %s47
      %p49 = scmp.eq.s32.totalorder %s23, 0
      %p50 = por %p48, %p49
      %s52 = sadd.s32 %s51, 1
      %p55 = scmp.eq.s32.totalorder %s17, 1
      %p56 = scmp.ne.s32.totalorder %s51, %s53
      %p57 = scmp.eq.s32.totalorder %s17, 0
      %p58 = por %p56, %p57
      %p59 = scmp.ne.s32.totalorder %s51, %s53
      %p60 = scmp.eq.s32.totalorder %s22, 1
      %p61 = por %p59, %p60
      %p62 = scmp.ne.s32.totalorder %s53, %s54
      %p63 = scmp.eq.s32.totalorder %s22, 0
      %p64 = por %p62, %p63
      %p65 = scmp.ne.s32.totalorder %s53, %s54
      %p66 = scmp.eq.s32.totalorder %s23, 1
      %p67 = por %p65, %p66
      %p69 = scmp.ne.s32.totalorder %s54, %s68
      %p70 = scmp.eq.s32.totalorder %s23, 0
      %p71 = por %p69, %p70
      %s73 = sadd.s32 %s72, 1
      %p76 = scmp.eq.s32.totalorder %s17, 1
      %p77 = scmp.ne.s32.totalorder %s72, %s74
      %p78 = scmp.eq.s32.totalorder %s17, 0
      %p79 = por %p77, %p78
      %p80 = scmp.ne.s32.totalorder %s72, %s74
      %p81 = scmp.eq.s32.totalorder %s22, 1
      %p82 = por %p80, %p81
      %p83 = scmp.ne.s32.totalorder %s74, %s75
      %p84 = scmp.eq.s32.totalorder %s22, 0
      %p85 = por %p83, %p84
      %p86 = scmp.ne.s32.totalorder %s74, %s75
      %p87 = scmp.eq.s32.totalorder %s23, 1
      %p88 = por %p86, %p87
      %p90 = scmp.ne.s32.totalorder %s75, %s89
      %p91 = scmp.eq.s32.totalorder %s23, 0
      %p92 = por %p90, %p91
      %s93 = ssub.s32 %s17, %s24
      %p94 = scmp.eq.s32.totalorder %s93, 0
      %s96 = sadd.s32 %s95, 1
      %s97 = scalar_select %p94, %s95, %s96
      %p100 = pneg %p94
      %p101 = scmp.eq.s32.totalorder %s17, 1
      %p102 = por %p100, %p101
      %p103 = scmp.ne.s32.totalorder %s95, %s98
      %p104 = scmp.eq.s32.totalorder %s17, 0
      %p105 = por %p103, %p104
      %p106 = scmp.ne.s32.totalorder %s95, %s98
      %p107 = scmp.eq.s32.totalorder %s22, 1
      %p108 = por %p106, %p107
      %p109 = scmp.ne.s32.totalorder %s98, %s99
      %p110 = scmp.eq.s32.totalorder %s22, 0
      %p111 = por %p109, %p110
      %p112 = scmp.ne.s32.totalorder %s98, %s99
      %p113 = scmp.eq.s32.totalorder %s23, 1
      %p114 = por %p112, %p113
      %p116 = scmp.ne.s32.totalorder %s99, %s115
      %p117 = scmp.eq.s32.totalorder %s23, 0
      %p118 = por %p116, %p117
      %p119 = scmp.le.s32.totalorder 1, %s17
      %p120 = scmp.lt.s32.totalorder %s17, 3
      %p121 = pnand %p119, %p120
      %p122 = pneg %p121
      // Predicated region
      $region9: #{tpu_custom_call.1} parent=5 // pred_check
        _
      $region10: #{tpu_custom_call.1} parent=5 // pred_check_branch
        %124 = sbr.rel (%p121) target = $region12
      $region11: #{tpu_custom_call.1} parent=5 // pred_region
        %s125 = ssub.s32 %s17, 1
        // Predicated region
        $region13: #{tpu_custom_call.1} parent=11 // pred_check
          %p126 = pneg %p64
        $region14: #{tpu_custom_call.1} parent=11 // pred_check_branch
          %128 = sbr.rel (%p126) target = $region16
        $region15: #{tpu_custom_call.1} parent=11 // pred_region
          %130 = vsyncadd [#allocation5], 0
          %s131 = sshll.u32 %s1, 4
          %s132 = int_to_ptr.vmem [resolvable:$true] %s131
          %137 = dma.vmem_to_smem %s132, 256, [#allocation6], [#allocation5], 128, 128, 8
        $region16: #{tpu_custom_call.1} parent=11 // pred_fallthru
          _
        // Predicated region
        $region17: #{tpu_custom_call.1} parent=11 // pred_check
          %p138 = pneg %p85
        $region18: #{tpu_custom_call.1} parent=11 // pred_check_branch
          %140 = sbr.rel (%p138) target = $region20
        $region19: #{tpu_custom_call.1} parent=11 // pred_region
          %142 = vsyncadd [#allocation8], 0
          %s144 = sshll.u32 %s2, 4
          %s145 = int_to_ptr.vmem [resolvable:$true] %s144
          %147 = dma.vmem_to_smem %s145, 64, [#allocation7], [#allocation8]
        $region20: #{tpu_custom_call.1} parent=11 // pred_fallthru
          _
      $region12: #{tpu_custom_call.1} parent=5 // pred_fallthru
        _
      %p148 = scmp.lt.s32.totalorder %s17, 2
      // Predicated region
      $region21: #{tpu_custom_call.1} parent=5 // pred_check
        %p149 = pneg %p148
      $region22: #{tpu_custom_call.1} parent=5 // pred_check_branch
        %151 = sbr.rel (%p149) target = $region24
      $region23: #{tpu_custom_call.1} parent=5 // pred_region
        // Predicated region
        $region25: #{tpu_custom_call.1} parent=23 // pred_check
          %p152 = pneg %p37
        $region26: #{tpu_custom_call.1} parent=23 // pred_check_branch
          %154 = sbr.rel (%p152) target = $region28
        $region27: #{tpu_custom_call.1} parent=23 // pred_region
          %s155 = sand.u32 %s27, 1
          %s156 = scalar_lea.sflag [#allocation3], %s155
          %s157 = sand.u32 %s27, 1
          %s158 = smul.addr %s157, 32
          %s159 = scalar_lea.vmem [#allocation2], %s158
          %161 = vsyncadd %s156, 0
          %s162 = smul.addr %s17, 2
          %s163 = smul.addr %s162, 8
          %s164 = scalar_lea.hbm %s0, %s163
          %s165 = sshll.u32 %s164, 4
          %s166 = int_to_ptr.hbm [resolvable:$true] %s165
          %s167 = sshll.u32 %s159, 4
          %s168 = int_to_ptr.vmem [resolvable:$true] %s167
          %173 = dma.hbm_to_vmem [thread:$0]  %s166, 512, %s168, %s156, 512, 256, 16
        $region28: #{tpu_custom_call.1} parent=23 // pred_fallthru
          _
      $region24: #{tpu_custom_call.1} parent=5 // pred_fallthru
        _
      %p174 = scmp.le.s32.totalorder 1, %s17
      %p175 = scmp.lt.s32.totalorder %s17, 3
      %p176 = pnand %p174, %p175
      %p177 = pneg %p176
      // Predicated region
      $region29: #{tpu_custom_call.1} parent=5 // pred_check
        _
      $region30: #{tpu_custom_call.1} parent=5 // pred_check_branch
        %179 = sbr.rel (%p176) target = $region32
      $region31: #{tpu_custom_call.1} parent=5 // pred_region
        %s180 = ssub.s32 %s17, 1
        %s181 = sand.u32 %s30, 1
        %s182 = scalar_lea.sflag [#allocation3], %s181
        %s183 = sand.u32 %s30, 1
        %s184 = smul.addr %s183, 32
        %s185 = scalar_lea.vmem [#allocation2], %s184
        // Predicated region
        $region33: #{tpu_custom_call.1} parent=31 // pred_check
          %p186 = pneg %p43
        $region34: #{tpu_custom_call.1} parent=31 // pred_check_branch
          %188 = sbr.rel (%p186) target = $region36
        $region35: #{tpu_custom_call.1} parent=31 // pred_region
          %190 = dma.done %s182, 512
        $region36: #{tpu_custom_call.1} parent=31 // pred_fallthru
          _
        // Predicated region
        $region37: #{tpu_custom_call.1} parent=31 // pred_check
          %p191 = pneg %p64
        $region38: #{tpu_custom_call.1} parent=31 // pred_check_branch
          %193 = sbr.rel (%p191) target = $region40
        $region39: #{tpu_custom_call.1} parent=31 // pred_region
          %195 = dma.done [#allocation5], 256
        $region40: #{tpu_custom_call.1} parent=31 // pred_fallthru
          _
        // Predicated region
        $region41: #{tpu_custom_call.1} parent=31 // pred_check
          %p196 = pneg %p85
        $region42: #{tpu_custom_call.1} parent=31 // pred_check_branch
          %198 = sbr.rel (%p196) target = $region44
        $region43: #{tpu_custom_call.1} parent=31 // pred_region
          %200 = dma.done [#allocation8], 64
        $region44: #{tpu_custom_call.1} parent=31 // pred_fallthru
          _
        %201 = sfence
        %s202 = sand.u32 %s30, 1
        %s203 = scalar_lea.sflag [#allocation3], %s202
        %s204 = sand.u32 %s30, 1
        %s205 = smul.addr %s204, 32
        %s206 = scalar_lea.vmem [#allocation2], %s205
        %p207 = pneg %p43
        %p208 = pneg %p40
        %p209 = pneg %p64
        %p210 = pneg %p61
        %p211 = pneg %p85
        %p212 = pneg %p82
        %p213 = pneg %p111
        %p214 = pneg %p108
        %s215 = sand.u32 %s98, 1
        %s216 = scalar_lea.sflag [#allocation4], %s215
        %s217 = sand.u32 %s98, 1
        %s218 = smul.addr %s217, 128
        %s219 = scalar_lea.vmem [#allocation9], %s218
        %v220 = vld [vmem:[%s185] sm:$0xff]
        %s221 = scalar_lea.vmem %s185, 16 [#allocation2]
        %v222 = vld [vmem:[%s221] sm:$0xff]
        %v223 = vld [vmem:[%s185 + $0x8] sm:$0xff]
        %v224 = vld [vmem:[%s221 + $0x8] sm:$0xff]
        %s225 = sld [smem:[#allocation6]]
        %v226 = vstv %s225
        %v227 = vmul.f32 %v220, %v226
        %s228 = sld [smem:[#allocation6 + $0x1]]
        %v229 = vstv %s228
        %v230 = vmul.f32 %v222, %v229
        %v231 = vadd.f32 %v227, %v230
        %s232 = sld [smem:[#allocation6 + $0x2]]
        %v233 = vstv %s232
        %v234 = vmul.f32 %v220, %v233
        %v235 = vmul.f32 %v223, %v233
        %238 = vrot.lane.b32.xlu0 %v234, 127
        %v239 = vpop.permute.xlu0 %238
        %240 = vrot.lane.b32.xlu0 %v235, 127
        %v241 = vpop.permute.xlu0 %240
        %vm242 = vcmask 1039360
        %v243 = vsel %vm242, %v239, %v241
        %v245 = vadd.f32 %v231, %v243
        %v246 = vmul.f32 %v222, %v226
        %v247 = vmul.f32 %v220, %v229
        %v248 = vmul.f32 %v223, %v229
        %251 = vrot.lane.b32.xlu0 %v247, 127
        %v252 = vpop.permute.xlu0 %251
        %253 = vrot.lane.b32.xlu0 %v248, 127
        %v254 = vpop.permute.xlu0 %253
        %v255 = vsel %vm242, %v252, %v254
        %v257 = vadd.f32 %v246, %v255
        %v258 = vmul.f32 %v222, %v233
        %v259 = vmul.f32 %v224, %v233
        %262 = vrot.lane.b32.xlu0 %v258, 127
        %v263 = vpop.permute.xlu0 %262
        %264 = vrot.lane.b32.xlu0 %v259, 127
        %v265 = vpop.permute.xlu0 %264
        %v266 = vsel %vm242, %v263, %v265
        %v268 = vadd.f32 %v257, %v266
        %v269 = vmax.f32 %v245, %v268
        %s270 = sld [smem:[#allocation7]]
        %v271 = vstv %s270
        %v272 = vadd.f32 %v269, %v271
        %v273 = vmax.f32 %v272, 0.0
        %s274 = sld [smem:[#allocation7 + $0x80]]
        %v275 = vstv %s274
        %v276 = vmul.f32 %v273, %v275
        %s277 = sld [smem:[#allocation7 + $0x100]]
        %v278 = vstv %s277
        %v279 = vadd.f32 %v276, %v278
        %280 = vst [vmem:[%s219] sm:$0xff] %v279
        %s281 = sld [smem:[#allocation6 + $0x80]]
        %v282 = vstv %s281
        %v283 = vmul.f32 %v220, %v282
        %s284 = sld [smem:[#allocation6 + $0x81]]
        %v285 = vstv %s284
        %v286 = vmul.f32 %v222, %v285
        %v287 = vadd.f32 %v283, %v286
        %s288 = sld [smem:[#allocation6 + $0x82]]
        %v289 = vstv %s288
        %v290 = vmul.f32 %v220, %v289
        %v291 = vmul.f32 %v223, %v289
        %294 = vrot.lane.b32.xlu0 %v290, 127
        %v295 = vpop.permute.xlu0 %294
        %296 = vrot.lane.b32.xlu0 %v291, 127
        %v297 = vpop.permute.xlu0 %296
        %v298 = vsel %vm242, %v295, %v297
        %v300 = vadd.f32 %v287, %v298
        %v301 = vmul.f32 %v222, %v282
        %v302 = vmul.f32 %v220, %v285
        %v303 = vmul.f32 %v223, %v285
        %306 = vrot.lane.b32.xlu0 %v302, 127
        %v307 = vpop.permute.xlu0 %306
        %308 = vrot.lane.b32.xlu0 %v303, 127
        %v309 = vpop.permute.xlu0 %308
        %v310 = vsel %vm242, %v307, %v309
        %v312 = vadd.f32 %v301, %v310
        %v313 = vmul.f32 %v222, %v289
        %v314 = vmul.f32 %v224, %v289
        %317 = vrot.lane.b32.xlu0 %v313, 127
        %v318 = vpop.permute.xlu0 %317
        %319 = vrot.lane.b32.xlu0 %v314, 127
        %v320 = vpop.permute.xlu0 %319
        %v321 = vsel %vm242, %v318, %v320
        %v323 = vadd.f32 %v312, %v321
        %v324 = vmax.f32 %v300, %v323
        %s325 = sld [smem:[#allocation7 + $0x1]]
        %v326 = vstv %s325
        %v327 = vadd.f32 %v324, %v326
        %v328 = vmax.f32 %v327, 0.0
        %s329 = sld [smem:[#allocation7 + $0x81]]
        %v330 = vstv %s329
        %v331 = vmul.f32 %v328, %v330
        %s332 = sld [smem:[#allocation7 + $0x101]]
        %v333 = vstv %s332
        %v334 = vadd.f32 %v331, %v333
        %335 = vst [vmem:[%s219 + $0x8] sm:$0xff] %v334
        %s336 = sld [smem:[#allocation6 + $0x100]]
        %v337 = vstv %s336
        %v338 = vmul.f32 %v220, %v337
        %s339 = sld [smem:[#allocation6 + $0x101]]
        %v340 = vstv %s339
        %v341 = vmul.f32 %v222, %v340
        %v342 = vadd.f32 %v338, %v341
        %s343 = sld [smem:[#allocation6 + $0x102]]
        %v344 = vstv %s343
        %v345 = vmul.f32 %v220, %v344
        %v346 = vmul.f32 %v223, %v344
        %349 = vrot.lane.b32.xlu0 %v345, 127
        %v350 = vpop.permute.xlu0 %349
        %351 = vrot.lane.b32.xlu0 %v346, 127
        %v352 = vpop.permute.xlu0 %351
        %v353 = vsel %vm242, %v350, %v352
        %v355 = vadd.f32 %v342, %v353
        %v356 = vmul.f32 %v222, %v337
        %v357 = vmul.f32 %v220, %v340
        %v358 = vmul.f32 %v223, %v340
        %361 = vrot.lane.b32.xlu0 %v357, 127
        %v362 = vpop.permute.xlu0 %361
        %363 = vrot.lane.b32.xlu0 %v358, 127
        %v364 = vpop.permute.xlu0 %363
        %v365 = vsel %vm242, %v362, %v364
        %v367 = vadd.f32 %v356, %v365
        %v368 = vmul.f32 %v222, %v344
        %v369 = vmul.f32 %v224, %v344
        %372 = vrot.lane.b32.xlu0 %v368, 127
        %v373 = vpop.permute.xlu0 %372
        %374 = vrot.lane.b32.xlu0 %v369, 127
        %v375 = vpop.permute.xlu0 %374
        %v376 = vsel %vm242, %v373, %v375
        %v378 = vadd.f32 %v367, %v376
        %v379 = vmax.f32 %v355, %v378
        %s380 = sld [smem:[#allocation7 + $0x2]]
        %v381 = vstv %s380
        %v382 = vadd.f32 %v379, %v381
        %v383 = vmax.f32 %v382, 0.0
        %s384 = sld [smem:[#allocation7 + $0x82]]
        %v385 = vstv %s384
        %v386 = vmul.f32 %v383, %v385
        %s387 = sld [smem:[#allocation7 + $0x102]]
        %v388 = vstv %s387
        %v389 = vadd.f32 %v386, %v388
        %390 = vst [vmem:[%s219 + $0x10] sm:$0xff] %v389
        %s391 = sld [smem:[#allocation6 + $0x180]]
        %v392 = vstv %s391
        %v393 = vmul.f32 %v220, %v392
        %s394 = sld [smem:[#allocation6 + $0x181]]
        %v395 = vstv %s394
        %v396 = vmul.f32 %v222, %v395
        %v397 = vadd.f32 %v393, %v396
        %s398 = sld [smem:[#allocation6 + $0x182]]
        %v399 = vstv %s398
        %v400 = vmul.f32 %v220, %v399
        %v401 = vmul.f32 %v223, %v399
        %404 = vrot.lane.b32.xlu0 %v400, 127
        %v405 = vpop.permute.xlu0 %404
        %406 = vrot.lane.b32.xlu0 %v401, 127
        %v407 = vpop.permute.xlu0 %406
        %v408 = vsel %vm242, %v405, %v407
        %v410 = vadd.f32 %v397, %v408
        %v411 = vmul.f32 %v222, %v392
        %v412 = vmul.f32 %v220, %v395
        %v413 = vmul.f32 %v223, %v395
        %416 = vrot.lane.b32.xlu0 %v412, 127
        %v417 = vpop.permute.xlu0 %416
        %418 = vrot.lane.b32.xlu0 %v413, 127
        %v419 = vpop.permute.xlu0 %418
        %v420 = vsel %vm242, %v417, %v419
        %v422 = vadd.f32 %v411, %v420
        %v423 = vmul.f32 %v222, %v399
        %v424 = vmul.f32 %v224, %v399
        %427 = vrot.lane.b32.xlu0 %v423, 127
        %v428 = vpop.permute.xlu0 %427
        %429 = vrot.lane.b32.xlu0 %v424, 127
        %v430 = vpop.permute.xlu0 %429
        %v431 = vsel %vm242, %v428, %v430
        %v433 = vadd.f32 %v422, %v431
        %v434 = vmax.f32 %v410, %v433
        %s435 = sld [smem:[#allocation7 + $0x3]]
        %v436 = vstv %s435
        %v437 = vadd.f32 %v434, %v436
        %v438 = vmax.f32 %v437, 0.0
        %s439 = sld [smem:[#allocation7 + $0x83]]
        %v440 = vstv %s439
        %v441 = vmul.f32 %v438, %v440
        %s442 = sld [smem:[#allocation7 + $0x103]]
        %v443 = vstv %s442
        %v444 = vadd.f32 %v441, %v443
        %445 = vst [vmem:[%s219 + $0x18] sm:$0xff] %v444
        %s446 = sld [smem:[#allocation6 + $0x200]]
        %v447 = vstv %s446
        %v448 = vmul.f32 %v220, %v447
        %s449 = sld [smem:[#allocation6 + $0x201]]
        %v450 = vstv %s449
        %v451 = vmul.f32 %v222, %v450
        %v452 = vadd.f32 %v448, %v451
        %s453 = sld [smem:[#allocation6 + $0x202]]
        %v454 = vstv %s453
        %v455 = vmul.f32 %v220, %v454
        %v456 = vmul.f32 %v223, %v454
        %459 = vrot.lane.b32.xlu0 %v455, 127
        %v460 = vpop.permute.xlu0 %459
        %461 = vrot.lane.b32.xlu0 %v456, 127
        %v462 = vpop.permute.xlu0 %461
        %v463 = vsel %vm242, %v460, %v462
        %v465 = vadd.f32 %v452, %v463
        %v466 = vmul.f32 %v222, %v447
        %v467 = vmul.f32 %v220, %v450
        %v468 = vmul.f32 %v223, %v450
        %471 = vrot.lane.b32.xlu0 %v467, 127
        %v472 = vpop.permute.xlu0 %471
        %473 = vrot.lane.b32.xlu0 %v468, 127
        %v474 = vpop.permute.xlu0 %473
        %v475 = vsel %vm242, %v472, %v474
        %v477 = vadd.f32 %v466, %v475
        %v478 = vmul.f32 %v222, %v454
        %v479 = vmul.f32 %v224, %v454
        %482 = vrot.lane.b32.xlu0 %v478, 127
        %v483 = vpop.permute.xlu0 %482
        %484 = vrot.lane.b32.xlu0 %v479, 127
        %v485 = vpop.permute.xlu0 %484
        %v486 = vsel %vm242, %v483, %v485
        %v488 = vadd.f32 %v477, %v486
        %v489 = vmax.f32 %v465, %v488
        %s490 = sld [smem:[#allocation7 + $0x4]]
        %v491 = vstv %s490
        %v492 = vadd.f32 %v489, %v491
        %v493 = vmax.f32 %v492, 0.0
        %s494 = sld [smem:[#allocation7 + $0x84]]
        %v495 = vstv %s494
        %v496 = vmul.f32 %v493, %v495
        %s497 = sld [smem:[#allocation7 + $0x104]]
        %v498 = vstv %s497
        %v499 = vadd.f32 %v496, %v498
        %500 = vst [vmem:[%s219 + $0x20] sm:$0xff] %v499
        %s501 = sld [smem:[#allocation6 + $0x280]]
        %v502 = vstv %s501
        %v503 = vmul.f32 %v220, %v502
        %s504 = sld [smem:[#allocation6 + $0x281]]
        %v505 = vstv %s504
        %v506 = vmul.f32 %v222, %v505
        %v507 = vadd.f32 %v503, %v506
        %s508 = sld [smem:[#allocation6 + $0x282]]
        %v509 = vstv %s508
        %v510 = vmul.f32 %v220, %v509
        %v511 = vmul.f32 %v223, %v509
        %514 = vrot.lane.b32.xlu0 %v510, 127
        %v515 = vpop.permute.xlu0 %514
        %516 = vrot.lane.b32.xlu0 %v511, 127
        %v517 = vpop.permute.xlu0 %516
        %v518 = vsel %vm242, %v515, %v517
        %v520 = vadd.f32 %v507, %v518
        %v521 = vmul.f32 %v222, %v502
        %v522 = vmul.f32 %v220, %v505
        %v523 = vmul.f32 %v223, %v505
        %526 = vrot.lane.b32.xlu0 %v522, 127
        %v527 = vpop.permute.xlu0 %526
        %528 = vrot.lane.b32.xlu0 %v523, 127
        %v529 = vpop.permute.xlu0 %528
        %v530 = vsel %vm242, %v527, %v529
        %v532 = vadd.f32 %v521, %v530
        %v533 = vmul.f32 %v222, %v509
        %v534 = vmul.f32 %v224, %v509
        %537 = vrot.lane.b32.xlu0 %v533, 127
        %v538 = vpop.permute.xlu0 %537
        %539 = vrot.lane.b32.xlu0 %v534, 127
        %v540 = vpop.permute.xlu0 %539
        %v541 = vsel %vm242, %v538, %v540
        %v543 = vadd.f32 %v532, %v541
        %v544 = vmax.f32 %v520, %v543
        %s545 = sld [smem:[#allocation7 + $0x5]]
        %v546 = vstv %s545
        %v547 = vadd.f32 %v544, %v546
        %v548 = vmax.f32 %v547, 0.0
        %s549 = sld [smem:[#allocation7 + $0x85]]
        %v550 = vstv %s549
        %v551 = vmul.f32 %v548, %v550
        %s552 = sld [smem:[#allocation7 + $0x105]]
        %v553 = vstv %s552
        %v554 = vadd.f32 %v551, %v553
        %555 = vst [vmem:[%s219 + $0x28] sm:$0xff] %v554
        %s556 = sld [smem:[#allocation6 + $0x300]]
        %v557 = vstv %s556
        %v558 = vmul.f32 %v220, %v557
        %s559 = sld [smem:[#allocation6 + $0x301]]
        %v560 = vstv %s559
        %v561 = vmul.f32 %v222, %v560
        %v562 = vadd.f32 %v558, %v561
        %s563 = sld [smem:[#allocation6 + $0x302]]
        %v564 = vstv %s563
        %v565 = vmul.f32 %v220, %v564
        %v566 = vmul.f32 %v223, %v564
        %569 = vrot.lane.b32.xlu0 %v565, 127
        %v570 = vpop.permute.xlu0 %569
        %571 = vrot.lane.b32.xlu0 %v566, 127
        %v572 = vpop.permute.xlu0 %571
        %v573 = vsel %vm242, %v570, %v572
        %v575 = vadd.f32 %v562, %v573
        %v576 = vmul.f32 %v222, %v557
        %v577 = vmul.f32 %v220, %v560
        %v578 = vmul.f32 %v223, %v560
        %581 = vrot.lane.b32.xlu0 %v577, 127
        %v582 = vpop.permute.xlu0 %581
        %583 = vrot.lane.b32.xlu0 %v578, 127
        %v584 = vpop.permute.xlu0 %583
        %v585 = vsel %vm242, %v582, %v584
        %v587 = vadd.f32 %v576, %v585
        %v588 = vmul.f32 %v222, %v564
        %v589 = vmul.f32 %v224, %v564
        %592 = vrot.lane.b32.xlu0 %v588, 127
        %v593 = vpop.permute.xlu0 %592
        %594 = vrot.lane.b32.xlu0 %v589, 127
        %v595 = vpop.permute.xlu0 %594
        %v596 = vsel %vm242, %v593, %v595
        %v598 = vadd.f32 %v587, %v596
        %v599 = vmax.f32 %v575, %v598
        %s600 = sld [smem:[#allocation7 + $0x6]]
        %v601 = vstv %s600
        %v602 = vadd.f32 %v599, %v601
        %v603 = vmax.f32 %v602, 0.0
        %s604 = sld [smem:[#allocation7 + $0x86]]
        %v605 = vstv %s604
        %v606 = vmul.f32 %v603, %v605
        %s607 = sld [smem:[#allocation7 + $0x106]]
        %v608 = vstv %s607
        %v609 = vadd.f32 %v606, %v608
        %610 = vst [vmem:[%s219 + $0x30] sm:$0xff] %v609
        %s611 = sld [smem:[#allocation6 + $0x380]]
        %v612 = vstv %s611
        %v613 = vmul.f32 %v220, %v612
        %s614 = sld [smem:[#allocation6 + $0x381]]
        %v615 = vstv %s614
        %v616 = vmul.f32 %v222, %v615
        %v617 = vadd.f32 %v613, %v616
        %s618 = sld [smem:[#allocation6 + $0x382]]
        %v619 = vstv %s618
        %v620 = vmul.f32 %v220, %v619
        %v621 = vmul.f32 %v223, %v619
        %624 = vrot.lane.b32.xlu0 %v620, 127
        %v625 = vpop.permute.xlu0 %624
        %626 = vrot.lane.b32.xlu0 %v621, 127
        %v627 = vpop.permute.xlu0 %626
        %v628 = vsel %vm242, %v625, %v627
        %v630 = vadd.f32 %v617, %v628
        %v631 = vmul.f32 %v222, %v612
        %v632 = vmul.f32 %v220, %v615
        %v633 = vmul.f32 %v223, %v615
        %636 = vrot.lane.b32.xlu0 %v632, 127
        %v637 = vpop.permute.xlu0 %636
        %638 = vrot.lane.b32.xlu0 %v633, 127
        %v639 = vpop.permute.xlu0 %638
        %v640 = vsel %vm242, %v637, %v639
        %v642 = vadd.f32 %v631, %v640
        %v643 = vmul.f32 %v222, %v619
        %v644 = vmul.f32 %v224, %v619
        %647 = vrot.lane.b32.xlu0 %v643, 127
        %v648 = vpop.permute.xlu0 %647
        %649 = vrot.lane.b32.xlu0 %v644, 127
        %v650 = vpop.permute.xlu0 %649
        %v651 = vsel %vm242, %v648, %v650
        %v653 = vadd.f32 %v642, %v651
        %v654 = vmax.f32 %v630, %v653
        %s655 = sld [smem:[#allocation7 + $0x7]]
        %v656 = vstv %s655
        %v657 = vadd.f32 %v654, %v656
        %v658 = vmax.f32 %v657, 0.0
        %s659 = sld [smem:[#allocation7 + $0x87]]
        %v660 = vstv %s659
        %v661 = vmul.f32 %v658, %v660
        %s662 = sld [smem:[#allocation7 + $0x107]]
        %v663 = vstv %s662
        %v664 = vadd.f32 %v661, %v663
        %665 = vst [vmem:[%s219 + $0x38] sm:$0xff] %v664
        %s666 = sld [smem:[#allocation6 + $0x400]]
        %v667 = vstv %s666
        %v668 = vmul.f32 %v220, %v667
        %s669 = sld [smem:[#allocation6 + $0x401]]
        %v670 = vstv %s669
        %v671 = vmul.f32 %v222, %v670
        %v672 = vadd.f32 %v668, %v671
        %s673 = sld [smem:[#allocation6 + $0x402]]
        %v674 = vstv %s673
        %v675 = vmul.f32 %v220, %v674
        %v676 = vmul.f32 %v223, %v674
        %679 = vrot.lane.b32.xlu0 %v675, 127
        %v680 = vpop.permute.xlu0 %679
        %681 = vrot.lane.b32.xlu0 %v676, 127
        %v682 = vpop.permute.xlu0 %681
        %v683 = vsel %vm242, %v680, %v682
        %v685 = vadd.f32 %v672, %v683
        %v686 = vmul.f32 %v222, %v667
        %v687 = vmul.f32 %v220, %v670
        %v688 = vmul.f32 %v223, %v670
        %691 = vrot.lane.b32.xlu0 %v687, 127
        %v692 = vpop.permute.xlu0 %691
        %693 = vrot.lane.b32.xlu0 %v688, 127
        %v694 = vpop.permute.xlu0 %693
        %v695 = vsel %vm242, %v692, %v694
        %v697 = vadd.f32 %v686, %v695
        %v698 = vmul.f32 %v222, %v674
        %v699 = vmul.f32 %v224, %v674
        %702 = vrot.lane.b32.xlu0 %v698, 127
        %v703 = vpop.permute.xlu0 %702
        %704 = vrot.lane.b32.xlu0 %v699, 127
        %v705 = vpop.permute.xlu0 %704
        %v706 = vsel %vm242, %v703, %v705
        %v708 = vadd.f32 %v697, %v706
        %v709 = vmax.f32 %v685, %v708
        %s710 = sld [smem:[#allocation7 + $0x8]]
        %v711 = vstv %s710
        %v712 = vadd.f32 %v709, %v711
        %v713 = vmax.f32 %v712, 0.0
        %s714 = sld [smem:[#allocation7 + $0x88]]
        %v715 = vstv %s714
        %v716 = vmul.f32 %v713, %v715
        %s717 = sld [smem:[#allocation7 + $0x108]]
        %v718 = vstv %s717
        %v719 = vadd.f32 %v716, %v718
        %720 = vst [vmem:[%s219 + $0x40] sm:$0xff] %v719
        %s721 = sld [smem:[#allocation6 + $0x480]]
        %v722 = vstv %s721
        %v723 = vmul.f32 %v220, %v722
        %s724 = sld [smem:[#allocation6 + $0x481]]
        %v725 = vstv %s724
        %v726 = vmul.f32 %v222, %v725
        %v727 = vadd.f32 %v723, %v726
        %s728 = sld [smem:[#allocation6 + $0x482]]
        %v729 = vstv %s728
        %v730 = vmul.f32 %v220, %v729
        %v731 = vmul.f32 %v223, %v729
        %734 = vrot.lane.b32.xlu0 %v730, 127
        %v735 = vpop.permute.xlu0 %734
        %736 = vrot.lane.b32.xlu0 %v731, 127
        %v737 = vpop.permute.xlu0 %736
        %v738 = vsel %vm242, %v735, %v737
        %v740 = vadd.f32 %v727, %v738
        %v741 = vmul.f32 %v222, %v722
        %v742 = vmul.f32 %v220, %v725
        %v743 = vmul.f32 %v223, %v725
        %746 = vrot.lane.b32.xlu0 %v742, 127
        %v747 = vpop.permute.xlu0 %746
        %748 = vrot.lane.b32.xlu0 %v743, 127
        %v749 = vpop.permute.xlu0 %748
        %v750 = vsel %vm242, %v747, %v749
        %v752 = vadd.f32 %v741, %v750
        %v753 = vmul.f32 %v222, %v729
        %v754 = vmul.f32 %v224, %v729
        %757 = vrot.lane.b32.xlu0 %v753, 127
        %v758 = vpop.permute.xlu0 %757
        %759 = vrot.lane.b32.xlu0 %v754, 127
        %v760 = vpop.permute.xlu0 %759
        %v761 = vsel %vm242, %v758, %v760
        %v763 = vadd.f32 %v752, %v761
        %v764 = vmax.f32 %v740, %v763
        %s765 = sld [smem:[#allocation7 + $0x9]]
        %v766 = vstv %s765
        %v767 = vadd.f32 %v764, %v766
        %v768 = vmax.f32 %v767, 0.0
        %s769 = sld [smem:[#allocation7 + $0x89]]
        %v770 = vstv %s769
        %v771 = vmul.f32 %v768, %v770
        %s772 = sld [smem:[#allocation7 + $0x109]]
        %v773 = vstv %s772
        %v774 = vadd.f32 %v771, %v773
        %775 = vst [vmem:[%s219 + $0x48] sm:$0xff] %v774
        %s776 = sld [smem:[#allocation6 + $0x500]]
        %v777 = vstv %s776
        %v778 = vmul.f32 %v220, %v777
        %s779 = sld [smem:[#allocation6 + $0x501]]
        %v780 = vstv %s779
        %v781 = vmul.f32 %v222, %v780
        %v782 = vadd.f32 %v778, %v781
        %s783 = sld [smem:[#allocation6 + $0x502]]
        %v784 = vstv %s783
        %v785 = vmul.f32 %v220, %v784
        %v786 = vmul.f32 %v223, %v784
        %789 = vrot.lane.b32.xlu0 %v785, 127
        %v790 = vpop.permute.xlu0 %789
        %791 = vrot.lane.b32.xlu0 %v786, 127
        %v792 = vpop.permute.xlu0 %791
        %v793 = vsel %vm242, %v790, %v792
        %v795 = vadd.f32 %v782, %v793
        %v796 = vmul.f32 %v222, %v777
        %v797 = vmul.f32 %v220, %v780
        %v798 = vmul.f32 %v223, %v780
        %801 = vrot.lane.b32.xlu0 %v797, 127
        %v802 = vpop.permute.xlu0 %801
        %803 = vrot.lane.b32.xlu0 %v798, 127
        %v804 = vpop.permute.xlu0 %803
        %v805 = vsel %vm242, %v802, %v804
        %v807 = vadd.f32 %v796, %v805
        %v808 = vmul.f32 %v222, %v784
        %v809 = vmul.f32 %v224, %v784
        %812 = vrot.lane.b32.xlu0 %v808, 127
        %v813 = vpop.permute.xlu0 %812
        %814 = vrot.lane.b32.xlu0 %v809, 127
        %v815 = vpop.permute.xlu0 %814
        %v816 = vsel %vm242, %v813, %v815
        %v818 = vadd.f32 %v807, %v816
        %v819 = vmax.f32 %v795, %v818
        %s820 = sld [smem:[#allocation7 + $0xa]]
        %v821 = vstv %s820
        %v822 = vadd.f32 %v819, %v821
        %v823 = vmax.f32 %v822, 0.0
        %s824 = sld [smem:[#allocation7 + $0x8a]]
        %v825 = vstv %s824
        %v826 = vmul.f32 %v823, %v825
        %s827 = sld [smem:[#allocation7 + $0x10a]]
        %v828 = vstv %s827
        %v829 = vadd.f32 %v826, %v828
        %830 = vst [vmem:[%s219 + $0x50] sm:$0xff] %v829
        %s831 = sld [smem:[#allocation6 + $0x580]]
        %v832 = vstv %s831
        %v833 = vmul.f32 %v220, %v832
        %s834 = sld [smem:[#allocation6 + $0x581]]
        %v835 = vstv %s834
        %v836 = vmul.f32 %v222, %v835
        %v837 = vadd.f32 %v833, %v836
        %s838 = sld [smem:[#allocation6 + $0x582]]
        %v839 = vstv %s838
        %v840 = vmul.f32 %v220, %v839
        %v841 = vmul.f32 %v223, %v839
        %844 = vrot.lane.b32.xlu0 %v840, 127
        %v845 = vpop.permute.xlu0 %844
        %846 = vrot.lane.b32.xlu0 %v841, 127
        %v847 = vpop.permute.xlu0 %846
        %v848 = vsel %vm242, %v845, %v847
        %v850 = vadd.f32 %v837, %v848
        %v851 = vmul.f32 %v222, %v832
        %v852 = vmul.f32 %v220, %v835
        %v853 = vmul.f32 %v223, %v835
        %856 = vrot.lane.b32.xlu0 %v852, 127
        %v857 = vpop.permute.xlu0 %856
        %858 = vrot.lane.b32.xlu0 %v853, 127
        %v859 = vpop.permute.xlu0 %858
        %v860 = vsel %vm242, %v857, %v859
        %v862 = vadd.f32 %v851, %v860
        %v863 = vmul.f32 %v222, %v839
        %v864 = vmul.f32 %v224, %v839
        %867 = vrot.lane.b32.xlu0 %v863, 127
        %v868 = vpop.permute.xlu0 %867
        %869 = vrot.lane.b32.xlu0 %v864, 127
        %v870 = vpop.permute.xlu0 %869
        %v871 = vsel %vm242, %v868, %v870
        %v873 = vadd.f32 %v862, %v871
        %v874 = vmax.f32 %v850, %v873
        %s875 = sld [smem:[#allocation7 + $0xb]]
        %v876 = vstv %s875
        %v877 = vadd.f32 %v874, %v876
        %v878 = vmax.f32 %v877, 0.0
        %s879 = sld [smem:[#allocation7 + $0x8b]]
        %v880 = vstv %s879
        %v881 = vmul.f32 %v878, %v880
        %s882 = sld [smem:[#allocation7 + $0x10b]]
        %v883 = vstv %s882
        %v884 = vadd.f32 %v881, %v883
        %885 = vst [vmem:[%s219 + $0x58] sm:$0xff] %v884
        %s886 = sld [smem:[#allocation6 + $0x600]]
        %v887 = vstv %s886
        %v888 = vmul.f32 %v220, %v887
        %s889 = sld [smem:[#allocation6 + $0x601]]
        %v890 = vstv %s889
        %v891 = vmul.f32 %v222, %v890
        %v892 = vadd.f32 %v888, %v891
        %s893 = sld [smem:[#allocation6 + $0x602]]
        %v894 = vstv %s893
        %v895 = vmul.f32 %v220, %v894
        %v896 = vmul.f32 %v223, %v894
        %899 = vrot.lane.b32.xlu0 %v895, 127
        %v900 = vpop.permute.xlu0 %899
        %901 = vrot.lane.b32.xlu0 %v896, 127
        %v902 = vpop.permute.xlu0 %901
        %v903 = vsel %vm242, %v900, %v902
        %v905 = vadd.f32 %v892, %v903
        %v906 = vmul.f32 %v222, %v887
        %v907 = vmul.f32 %v220, %v890
        %v908 = vmul.f32 %v223, %v890
        %911 = vrot.lane.b32.xlu0 %v907, 127
        %v912 = vpop.permute.xlu0 %911
        %913 = vrot.lane.b32.xlu0 %v908, 127
        %v914 = vpop.permute.xlu0 %913
        %v915 = vsel %vm242, %v912, %v914
        %v917 = vadd.f32 %v906, %v915
        %v918 = vmul.f32 %v222, %v894
        %v919 = vmul.f32 %v224, %v894
        %922 = vrot.lane.b32.xlu0 %v918, 127
        %v923 = vpop.permute.xlu0 %922
        %924 = vrot.lane.b32.xlu0 %v919, 127
        %v925 = vpop.permute.xlu0 %924
        %v926 = vsel %vm242, %v923, %v925
        %v928 = vadd.f32 %v917, %v926
        %v929 = vmax.f32 %v905, %v928
        %s930 = sld [smem:[#allocation7 + $0xc]]
        %v931 = vstv %s930
        %v932 = vadd.f32 %v929, %v931
        %v933 = vmax.f32 %v932, 0.0
        %s934 = sld [smem:[#allocation7 + $0x8c]]
        %v935 = vstv %s934
        %v936 = vmul.f32 %v933, %v935
        %s937 = sld [smem:[#allocation7 + $0x10c]]
        %v938 = vstv %s937
        %v939 = vadd.f32 %v936, %v938
        %940 = vst [vmem:[%s219 + $0x60] sm:$0xff] %v939
        %s941 = sld [smem:[#allocation6 + $0x680]]
        %v942 = vstv %s941
        %v943 = vmul.f32 %v220, %v942
        %s944 = sld [smem:[#allocation6 + $0x681]]
        %v945 = vstv %s944
        %v946 = vmul.f32 %v222, %v945
        %v947 = vadd.f32 %v943, %v946
        %s948 = sld [smem:[#allocation6 + $0x682]]
        %v949 = vstv %s948
        %v950 = vmul.f32 %v220, %v949
        %v951 = vmul.f32 %v223, %v949
        %954 = vrot.lane.b32.xlu0 %v950, 127
        %v955 = vpop.permute.xlu0 %954
        %956 = vrot.lane.b32.xlu0 %v951, 127
        %v957 = vpop.permute.xlu0 %956
        %v958 = vsel %vm242, %v955, %v957
        %v960 = vadd.f32 %v947, %v958
        %v961 = vmul.f32 %v222, %v942
        %v962 = vmul.f32 %v220, %v945
        %v963 = vmul.f32 %v223, %v945
        %966 = vrot.lane.b32.xlu0 %v962, 127
        %v967 = vpop.permute.xlu0 %966
        %968 = vrot.lane.b32.xlu0 %v963, 127
        %v969 = vpop.permute.xlu0 %968
        %v970 = vsel %vm242, %v967, %v969
        %v972 = vadd.f32 %v961, %v970
        %v973 = vmul.f32 %v222, %v949
        %v974 = vmul.f32 %v224, %v949
        %977 = vrot.lane.b32.xlu0 %v973, 127
        %v978 = vpop.permute.xlu0 %977
        %979 = vrot.lane.b32.xlu0 %v974, 127
        %v980 = vpop.permute.xlu0 %979
        %v981 = vsel %vm242, %v978, %v980
        %v983 = vadd.f32 %v972, %v981
        %v984 = vmax.f32 %v960, %v983
        %s985 = sld [smem:[#allocation7 + $0xd]]
        %v986 = vstv %s985
        %v987 = vadd.f32 %v984, %v986
        %v988 = vmax.f32 %v987, 0.0
        %s989 = sld [smem:[#allocation7 + $0x8d]]
        %v990 = vstv %s989
        %v991 = vmul.f32 %v988, %v990
        %s992 = sld [smem:[#allocation7 + $0x10d]]
        %v993 = vstv %s992
        %v994 = vadd.f32 %v991, %v993
        %995 = vst [vmem:[%s219 + $0x68] sm:$0xff] %v994
        %s996 = sld [smem:[#allocation6 + $0x700]]
        %v997 = vstv %s996
        %v998 = vmul.f32 %v220, %v997
        %s999 = sld [smem:[#allocation6 + $0x701]]
        %v1000 = vstv %s999
        %v1001 = vmul.f32 %v222, %v1000
        %v1002 = vadd.f32 %v998, %v1001
        %s1003 = sld [smem:[#allocation6 + $0x702]]
        %v1004 = vstv %s1003
        %v1005 = vmul.f32 %v220, %v1004
        %v1006 = vmul.f32 %v223, %v1004
        %1009 = vrot.lane.b32.xlu0 %v1005, 127
        %v1010 = vpop.permute.xlu0 %1009
        %1011 = vrot.lane.b32.xlu0 %v1006, 127
        %v1012 = vpop.permute.xlu0 %1011
        %v1013 = vsel %vm242, %v1010, %v1012
        %v1015 = vadd.f32 %v1002, %v1013
        %v1016 = vmul.f32 %v222, %v997
        %v1017 = vmul.f32 %v220, %v1000
        %v1018 = vmul.f32 %v223, %v1000
        %1021 = vrot.lane.b32.xlu0 %v1017, 127
        %v1022 = vpop.permute.xlu0 %1021
        %1023 = vrot.lane.b32.xlu0 %v1018, 127
        %v1024 = vpop.permute.xlu0 %1023
        %v1025 = vsel %vm242, %v1022, %v1024
        %v1027 = vadd.f32 %v1016, %v1025
        %v1028 = vmul.f32 %v222, %v1004
        %v1029 = vmul.f32 %v224, %v1004
        %1032 = vrot.lane.b32.xlu0 %v1028, 127
        %v1033 = vpop.permute.xlu0 %1032
        %1034 = vrot.lane.b32.xlu0 %v1029, 127
        %v1035 = vpop.permute.xlu0 %1034
        %v1036 = vsel %vm242, %v1033, %v1035
        %v1038 = vadd.f32 %v1027, %v1036
        %v1039 = vmax.f32 %v1015, %v1038
        %s1040 = sld [smem:[#allocation7 + $0xe]]
        %v1041 = vstv %s1040
        %v1042 = vadd.f32 %v1039, %v1041
        %v1043 = vmax.f32 %v1042, 0.0
        %s1044 = sld [smem:[#allocation7 + $0x8e]]
        %v1045 = vstv %s1044
        %v1046 = vmul.f32 %v1043, %v1045
        %s1047 = sld [smem:[#allocation7 + $0x10e]]
        %v1048 = vstv %s1047
        %v1049 = vadd.f32 %v1046, %v1048
        %1050 = vst [vmem:[%s219 + $0x70] sm:$0xff] %v1049
        %s1051 = sld [smem:[#allocation6 + $0x780]]
        %v1052 = vstv %s1051
        %v1053 = vmul.f32 %v220, %v1052
        %s1054 = sld [smem:[#allocation6 + $0x781]]
        %v1055 = vstv %s1054
        %v1056 = vmul.f32 %v222, %v1055
        %v1057 = vadd.f32 %v1053, %v1056
        %s1058 = sld [smem:[#allocation6 + $0x782]]
        %v1059 = vstv %s1058
        %v1060 = vmul.f32 %v220, %v1059
        %v1061 = vmul.f32 %v223, %v1059
        %1064 = vrot.lane.b32.xlu0 %v1060, 127
        %v1065 = vpop.permute.xlu0 %1064
        %1066 = vrot.lane.b32.xlu0 %v1061, 127
        %v1067 = vpop.permute.xlu0 %1066
        %v1068 = vsel %vm242, %v1065, %v1067
        %v1070 = vadd.f32 %v1057, %v1068
        %v1071 = vmul.f32 %v222, %v1052
        %v1072 = vmul.f32 %v220, %v1055
        %v1073 = vmul.f32 %v223, %v1055
        %1076 = vrot.lane.b32.xlu0 %v1072, 127
        %v1077 = vpop.permute.xlu0 %1076
        %1078 = vrot.lane.b32.xlu0 %v1073, 127
        %v1079 = vpop.permute.xlu0 %1078
        %v1080 = vsel %vm242, %v1077, %v1079
        %v1082 = vadd.f32 %v1071, %v1080
        %v1083 = vmul.f32 %v222, %v1059
        %v1084 = vmul.f32 %v224, %v1059
        %1087 = vrot.lane.b32.xlu0 %v1083, 127
        %v1088 = vpop.permute.xlu0 %1087
        %1089 = vrot.lane.b32.xlu0 %v1084, 127
        %v1090 = vpop.permute.xlu0 %1089
        %v1091 = vsel %vm242, %v1088, %v1090
        %v1093 = vadd.f32 %v1082, %v1091
        %v1094 = vmax.f32 %v1070, %v1093
        %s1095 = sld [smem:[#allocation7 + $0xf]]
        %v1096 = vstv %s1095
        %v1097 = vadd.f32 %v1094, %v1096
        %v1098 = vmax.f32 %v1097, 0.0
        %s1099 = sld [smem:[#allocation7 + $0x8f]]
        %v1100 = vstv %s1099
        %v1101 = vmul.f32 %v1098, %v1100
        %s1102 = sld [smem:[#allocation7 + $0x10f]]
        %v1103 = vstv %s1102
        %v1104 = vadd.f32 %v1101, %v1103
        %1105 = vst [vmem:[%s219 + $0x78] sm:$0xff] %v1104
        %s1106 = sand.u32 %s98, 1
        %s1107 = scalar_lea.sflag [#allocation4], %s1106
        %s1108 = sand.u32 %s98, 1
        %s1109 = smul.addr %s1108, 128
        %s1110 = scalar_lea.vmem [#allocation9], %s1109
        // Predicated region
        $region45: #{tpu_custom_call.1} parent=31 // pred_check
          %p1111 = pneg %p108
        $region46: #{tpu_custom_call.1} parent=31 // pred_check_branch
          %1113 = sbr.rel (%p1111) target = $region48
        $region47: #{tpu_custom_call.1} parent=31 // pred_region
          %1115 = vsyncadd %s1107, 0
          %s1116 = smul.addr %s22, 16
          %s1117 = smul.addr %s1116, 8
          %s1118 = scalar_lea.hbm %s3, %s1117
          %s1120 = sshll.u32 %s1110, 4
          %s1121 = int_to_ptr.vmem [resolvable:$true] %s1120
          %s1122 = sshll.u32 %s1118, 4
          %s1123 = int_to_ptr.hbm [resolvable:$true] %s1122
          %1125 = dma.vmem_to_hbm [thread:$0]  %s1121, 2048, %s1123, %s1107
        $region48: #{tpu_custom_call.1} parent=31 // pred_fallthru
          _
      $region32: #{tpu_custom_call.1} parent=5 // pred_fallthru
        _
      %p1126 = scmp.le.s32.totalorder 2, %s17
      // Predicated region
      $region49: #{tpu_custom_call.1} parent=5 // pred_check
        %p1127 = pneg %p1126
      $region50: #{tpu_custom_call.1} parent=5 // pred_check_branch
        %1129 = sbr.rel (%p1127) target = $region52
      $region51: #{tpu_custom_call.1} parent=5 // pred_region
        %s1130 = ssub.s32 %s17, 2
        // Predicated region
        $region53: #{tpu_custom_call.1} parent=51 // pred_check
          %p1131 = pneg %p114
        $region54: #{tpu_custom_call.1} parent=51 // pred_check_branch
          %1133 = sbr.rel (%p1131) target = $region56
        $region55: #{tpu_custom_call.1} parent=51 // pred_region
          %s1134 = sand.u32 %s99, 1
          %s1135 = scalar_lea.sflag [#allocation4], %s1134
          %s1136 = sand.u32 %s99, 1
          %s1137 = smul.addr %s1136, 128
          %s1138 = scalar_lea.vmem [#allocation9], %s1137
          %1140 = dma.done %s1135, 2048
        $region56: #{tpu_custom_call.1} parent=51 // pred_fallthru
          _
      $region52: #{tpu_custom_call.1} parent=5 // pred_fallthru
        _
    $region6: #{tpu_custom_call.1} parent=1 // loop_footer
      %s21 = sadd.s32 1, %s17
    $region7: #{tpu_custom_call.1} parent=1 // loop_footer_branch
      %16 = sbr.rel target = $region3
    $region8: #{tpu_custom_call.1} parent=1 // loop_exit
      _
    %1141 = vsyncpa [#allocation3], 1
    %s1142 = scalar_lea.sflag [#allocation3], 1
    %1143 = vsyncpa %s1142, 1
    %1144 = vsyncpa [#allocation4], 1
    %s1145 = scalar_lea.sflag [#allocation4], 1
    %1146 = vsyncpa %s1145, 1
    %1147 = vsyncpa [#allocation5], 1
    %s1148 = scalar_lea.sflag [#allocation5], 1
    %1149 = vsyncpa %s1148, 1
    %1150 = vsyncpa [#allocation8], 1

</llo_original>
